<compile_context>
chip_gen: v6e
topology: v6e:2x2x1
jax: 0.10.0
libtpu: 0.0.40
codegen_flags: <defaults>
</compile_context>

<pallas_src>
import functools

import jax
import jax.numpy as jnp
from jax import lax
from jax.experimental import pallas as pl
from jax.experimental.pallas import tpu as pltpu


def _round_up(x, m):
    return ((x + m - 1) // m) * m


# ---------------------------------------------------------------------------
# Kernel 1: sequential LSTM recurrence (emits hidden states only).
# ---------------------------------------------------------------------------
def _lstm_kernel(x_ref, w_ref, b_ref, h_out_ref, h_sc, c_sc):
    """One grid step = one chunk of Tc time steps.

    x_ref:     (Tc, Bp, Ep)     input chunk, time-major, padded
    w_ref:     (Ep+Hp, 4*Hp)    fused [W_ih; W_hh] (pre-transposed, gate-padded)
    b_ref:     (1, 4*Hp)        combined bias b_ih + b_hh (gate-padded)
    h_out_ref: (Tc, Bp, Hp)     hidden states for this chunk
    h_sc, c_sc:(Bp, Hp)         carried LSTM state (VMEM scratch)
    """
    @pl.when(pl.program_id(0) == 0)
    def _():
        h_sc[...] = jnp.zeros_like(h_sc)
        c_sc[...] = jnp.zeros_like(c_sc)

    Hp = h_sc.shape[-1]
    Tc = x_ref.shape[0]
    w = w_ref[...]          # hoisted: constant across the chunk
    b = b_ref[...]

    def step(t, carry):
        x_t = x_ref[t]                                      # (Bp, Ep)
        xh = jnp.concatenate([x_t, h_sc[...]], axis=-1)     # (Bp, Ep+Hp), lane-aligned
        gates = jnp.dot(xh, w, preferred_element_type=jnp.float32) + b   # (Bp, 4Hp)
        # PyTorch gate order i, f, g, o; each block is 128-lane aligned (Hp % 128 == 0).
        i_g = jax.nn.sigmoid(gates[:, 0 * Hp:1 * Hp])
        f_g = jax.nn.sigmoid(gates[:, 1 * Hp:2 * Hp])
        g_g = jnp.tanh(gates[:, 2 * Hp:3 * Hp])
        o_g = jax.nn.sigmoid(gates[:, 3 * Hp:4 * Hp])
        c_new = f_g * c_sc[...] + i_g * g_g
        h_new = o_g * jnp.tanh(c_new)
        c_sc[...] = c_new
        h_sc[...] = h_new
        h_out_ref[t] = h_new.astype(h_out_ref.dtype)
        return carry

    lax.fori_loop(0, Tc, step, 0, unroll=True)


# ---------------------------------------------------------------------------
# Kernel 2: fc / vocab projection as a plain tiled, fully parallel matmul.
# ---------------------------------------------------------------------------
def _fc_kernel(h_ref, w_ref, b_ref, o_ref):
    """h_ref: (tm, Hp); w_ref: (Hp, tn); b_ref: (1, tn); o_ref: (tm, tn)."""
    o_ref[...] = (jnp.dot(h_ref[...], w_ref[...], preferred_element_type=jnp.float32)
                  + b_ref[...]).astype(o_ref.dtype)


@jax.jit
def lstm_fc_pallas(inputs_tbe, w_ih, w_hh, b_ih, b_hh, w_fc, b_fc):
    """inputs_tbe: (T, B, E) float32, time-major. Returns logits (B, T, V)."""
    T, B, E = inputs_tbe.shape
    H = w_hh.shape[1]
    V = w_fc.shape[0]
    dt = jnp.float32

    # Padded / tiled sizes.
    Bp = _round_up(B, 8)            # sublane minimum for f32
    Ep = _round_up(E, 128)          # lane-aligned input width
    Hp = _round_up(H, 128)          # lane-aligned gate blocks / hidden width
    Vp = _round_up(V, 128)          # lane-dense logits
    Tc = max(1, min(T, 256 // Bp))  # time steps per grid chunk (~256 rows per FC tile)
    Tp = _round_up(T, Tc)
    n_chunks = Tp // Tc

    # ---- pack / pad parameters (each gate block padded to Hp lanes) ----
    def gate_pad_cols(w_t, n_rows_real, n_rows_pad):
        out = jnp.zeros((n_rows_pad, 4 * Hp), dt)
        for k in range(4):
            out = out.at[:n_rows_real, k * Hp:k * Hp + H].set(
                w_t[:, k * H:(k + 1) * H].astype(dt))
        return out

    w_cat = jnp.concatenate(
        [gate_pad_cols(w_ih.T, E, Ep), gate_pad_cols(w_hh.T, H, Hp)], axis=0)  # (Ep+Hp, 4Hp)
    b_comb = (b_ih + b_hh).astype(dt)
    b_pad = jnp.zeros((1, 4 * Hp), dt)
    for k in range(4):
        b_pad = b_pad.at[0, k * Hp:k * Hp + H].set(b_comb[k * H:(k + 1) * H])

    wfc_pad = jnp.zeros((Hp, Vp), dt).at[:H, :V].set(w_fc.T.astype(dt))
    bfc_pad = jnp.zeros((1, Vp), dt).at[0, :V].set(b_fc.astype(dt))

    x_pad = jnp.zeros((Tp, Bp, Ep), dt).at[:T, :B, :E].set(inputs_tbe.astype(dt))

    # ---- kernel 1: sequential recurrence -> hidden states (Tp, Bp, Hp) ----
    lstm_cost = pl.CostEstimate(
        flops=int(2 * Tp * Bp * (Ep + Hp) * 4 * Hp + 10 * Tp * Bp * Hp),
        transcendentals=int(5 * Tp * Bp * Hp),
        bytes_accessed=int(4 * (Tp * Bp * Ep + (Ep + Hp) * 4 * Hp + 4 * Hp + Tp * Bp * Hp)),
    )
    h_all = pl.pallas_call(
        _lstm_kernel,
        out_shape=jax.ShapeDtypeStruct((Tp, Bp, Hp), dt),
        grid_spec=pltpu.PrefetchScalarGridSpec(
            num_scalar_prefetch=0,
            grid=(n_chunks,),
            in_specs=[
                pl.BlockSpec((Tc, Bp, Ep), lambda c: (c, 0, 0)),
                pl.BlockSpec((Ep + Hp, 4 * Hp), lambda c: (0, 0)),   # weights resident
                pl.BlockSpec((1, 4 * Hp), lambda c: (0, 0)),
            ],
            out_specs=pl.BlockSpec((Tc, Bp, Hp), lambda c: (c, 0, 0)),
            scratch_shapes=[
                pltpu.VMEM((Bp, Hp), jnp.float32),   # h state
                pltpu.VMEM((Bp, Hp), jnp.float32),   # c state
            ],
        ),
        compiler_params=pltpu.CompilerParams(
            dimension_semantics=("arbitrary",),      # true recurrence over time
        ),
        cost_estimate=lstm_cost,
    )(x_pad, w_cat, b_pad)

    # ---- kernel 2: fc projection (Tp*Bp, Hp) x (Hp, Vp), fully parallel ----
    M = Tp * Bp
    tm = Tc * Bp                       # divides M exactly; multiple of 8
    if Vp % 512 == 0:
        tn = 512
    elif Vp % 256 == 0:
        tn = 256
    else:
        tn = 128

    h2d = h_all.reshape(M, Hp)         # metadata-only collapse of leading dims
    fc_cost = pl.CostEstimate(
        flops=int(2 * M * Hp * Vp),
        transcendentals=0,
        bytes_accessed=int(4 * (M * Hp + Hp * Vp + Vp + M * Vp)),
    )
    logits2d = pl.pallas_call(
        _fc_kernel,
        out_shape=jax.ShapeDtypeStruct((M, Vp), dt),
        grid_spec=pltpu.PrefetchScalarGridSpec(
            num_scalar_prefetch=0,
            grid=(M // tm, Vp // tn),
            in_specs=[
                pl.BlockSpec((tm, Hp), lambda i, j: (i, 0)),
                pl.BlockSpec((Hp, tn), lambda i, j: (0, j)),
                pl.BlockSpec((1, tn), lambda i, j: (0, j)),
            ],
            out_specs=pl.BlockSpec((tm, tn), lambda i, j: (i, j)),
        ),
        compiler_params=pltpu.CompilerParams(
            dimension_semantics=("parallel", "parallel"),   # shards across TCs on v7x
        ),
        cost_estimate=fc_cost,
    )(h2d, wfc_pad, bfc_pad)

    logits_pad = logits2d.reshape(Tp, Bp, Vp)
    # Single transpose of the sliced logits back to batch-major (B, T, V).
    return jnp.transpose(logits_pad[:T, :B, :V], (1, 0, 2))


class DecoderRNNPallas:
    def __init__(self, embed_size, hidden_size, vocab_size, key):
        ks = jax.random.split(key, 7)
        s = 1.0 / jnp.sqrt(hidden_size)
        self.embedding = jax.random.normal(ks[0], (vocab_size, embed_size), jnp.float32)
        self.w_ih = jax.random.uniform(ks[1], (4 * hidden_size, embed_size), jnp.float32, -s, s)
        self.w_hh = jax.random.uniform(ks[2], (4 * hidden_size, hidden_size), jnp.float32, -s, s)
        self.b_ih = jax.random.uniform(ks[3], (4 * hidden_size,), jnp.float32, -s, s)
        self.b_hh = jax.random.uniform(ks[4], (4 * hidden_size,), jnp.float32, -s, s)
        self.w_fc = jax.random.uniform(ks[5], (vocab_size, hidden_size), jnp.float32, -s, s)
        self.b_fc = jax.random.uniform(ks[6], (vocab_size,), jnp.float32, -s, s)

    def forward(self, features, captions):
        # features: (B, embed_size) f32; captions: (B, L) int32
        # Gather embeddings directly in time-major order (avoids activation transpose).
        emb_tbe = jnp.take(self.embedding, captions[:, :-1].T, axis=0)        # (L-1, B, E)
        inputs_tbe = jnp.concatenate([features[None, :, :], emb_tbe], axis=0)  # (L, B, E)
        return lstm_fc_pallas(inputs_tbe, self.w_ih, self.w_hh,
                              self.b_ih, self.b_hh, self.w_fc, self.b_fc)

    # Pure-JAX reference (same math) for a quick sanity check.
    def forward_ref(self, features, captions):
        emb = jnp.take(self.embedding, captions[:, :-1], axis=0)
        inputs = jnp.concatenate([features[:, None, :], emb], axis=1)
        B, T, E = inputs.shape
        H = self.w_hh.shape[1]
        h = jnp.zeros((B, H), jnp.float32)
        c = jnp.zeros((B, H), jnp.float32)
        outs = []
        for t in range(T):
            g = inputs[:, t] @ self.w_ih.T + h @ self.w_hh.T + self.b_ih + self.b_hh
            i = jax.nn.sigmoid(g[:, 0:H])
            f = jax.nn.sigmoid(g[:, H:2 * H])
            gg = jnp.tanh(g[:, 2 * H:3 * H])
            o = jax.nn.sigmoid(g[:, 3 * H:4 * H])
            c = f * c + i * gg
            h = o * jnp.tanh(c)
            outs.append(h @ self.w_fc.T + self.b_fc)
        return jnp.stack(outs, axis=1)


if __name__ == "__main__":
    embed_size, hidden_size, vocab_size = 32, 32, 64
    B, cap_len = 2, 8   # LSTM sequence length = cap_len (features + cap_len-1 tokens)

    key = jax.random.PRNGKey(0)
    k_model, k_feat, k_cap = jax.random.split(key, 3)

    model = DecoderRNNPallas(embed_size, hidden_size, vocab_size, k_model)
    features = jax.random.normal(k_feat, (B, embed_size), jnp.float32)
    captions = jax.random.randint(k_cap, (B, cap_len), 0, vocab_size, jnp.int32)

    out = model.forward(features, captions)
    out = jax.block_until_ready(out)

    ref = model.forward_ref(features, captions)
    assert out.shape == (B, cap_len, vocab_size), out.shape
    max_err = float(jnp.abs(out - ref).max())
    assert jnp.allclose(out, ref, atol=1e-4, rtol=1e-4), max_err

    print("KERNEL_OK")
</pallas_src>

<mosaic_0001>
module attributes {stable_mosaic.version = 11 : i64} {
  func.func @_lstm_kernel(%arg0: i32, %arg1: memref<8x8x128xf32, #tpu.memory_space<vmem>>, %arg2: memref<256x512xf32, #tpu.memory_space<vmem>>, %arg3: memref<1x512xf32, #tpu.memory_space<vmem>>, %arg4: memref<8x8x128xf32, #tpu.memory_space<vmem>>, %arg5: memref<8x128xf32, #tpu.memory_space<vmem>>, %arg6: memref<8x128xf32, #tpu.memory_space<vmem>>) attributes {dimension_semantics = [#tpu.dimension_semantics<arbitrary>], iteration_bounds = array<i64: 1>, scalar_prefetch = 0 : i64, scratch_operands = 2 : i64, tpu.core_type = #tpu.core_type<tc>, window_params = [{transform_indices = @transform_0, window_bounds = array<i64: 8, 8, 128>}, {pipeline_mode = #tpu.pipeline_mode<synchronous>, transform_indices = @transform_1, window_bounds = array<i64: 256, 512>}, {pipeline_mode = #tpu.pipeline_mode<synchronous>, transform_indices = @transform_2, window_bounds = array<i64: 1, 512>}, {transform_indices = @transform_3, window_bounds = array<i64: 8, 8, 128>}]} {
    %c0_i32 = arith.constant 0 : i32
    %0 = arith.cmpi eq, %arg0, %c0_i32 : i32
    %1 = arith.extui %0 : i1 to i32
    %c0_i32_0 = arith.constant 0 : i32
    %2 = arith.cmpi ne, %1, %c0_i32_0 : i32
    scf.if %2 {
      %cst_132 = arith.constant 0.000000e+00 : f32
      %325 = vector.broadcast %cst_132 : f32 to vector<8x128xf32>
      %c0_133 = arith.constant 0 : index
      %c0_134 = arith.constant 0 : index
      %326 = vector.load %arg5[%c0_133, %c0_134] : memref<8x128xf32, #tpu.memory_space<vmem>>, vector<8x128xf32>
      tpu.vector_store %arg5[%c0_133, %c0_134], %325 {strides = array<i32>} : memref<8x128xf32, #tpu.memory_space<vmem>>, vector<8x128xf32>,
      %cst_135 = arith.constant 0.000000e+00 : f32
      %327 = vector.broadcast %cst_135 : f32 to vector<8x128xf32>
      %c0_136 = arith.constant 0 : index
      %c0_137 = arith.constant 0 : index
      %328 = vector.load %arg6[%c0_136, %c0_137] : memref<8x128xf32, #tpu.memory_space<vmem>>, vector<8x128xf32>
      tpu.vector_store %arg6[%c0_136, %c0_137], %327 {strides = array<i32>} : memref<8x128xf32, #tpu.memory_space<vmem>>, vector<8x128xf32>,
    } else {
    }
    %c0 = arith.constant 0 : index
    %c0_1 = arith.constant 0 : index
    %3 = vector.load %arg2[%c0, %c0_1] : memref<256x512xf32, #tpu.memory_space<vmem>>, vector<256x512xf32>
    %c0_2 = arith.constant 0 : index
    %c0_3 = arith.constant 0 : index
    %4 = vector.load %arg3[%c0_2, %c0_3] : memref<1x512xf32, #tpu.memory_space<vmem>>, vector<1x512xf32>
    %c0_i32_4 = arith.constant 0 : i32
    %5 = arith.index_cast %c0_i32_4 : i32 to index
    %c0_5 = arith.constant 0 : index
    %c0_6 = arith.constant 0 : index
    %6 = vector.load %arg1[%5, %c0_5, %c0_6] : memref<8x8x128xf32, #tpu.memory_space<vmem>>, vector<1x8x128xf32>
    %7 = vector.shape_cast %6 : vector<1x8x128xf32> to vector<8x128xf32>
    %c0_7 = arith.constant 0 : index
    %c0_8 = arith.constant 0 : index
    %8 = vector.load %arg5[%c0_7, %c0_8] : memref<8x128xf32, #tpu.memory_space<vmem>>, vector<8x128xf32>
    %9 = tpu.concatenate %7, %8 in 1 : vector<8x128xf32>, vector<8x128xf32> -> vector<8x256xf32>
    %cst = arith.constant dense<0.000000e+00> : vector<8x512xf32>
    %10 = tpu.matmul %9, %3, %cst {dimension_numbers = #tpu.dot_dimension_numbers<[1], [0], [0], [1], [0, 0, 1, 1], [], []>} : vector<8x256xf32>, vector<256x512xf32>, vector<8x512xf32> -> vector<8x512xf32>
    %11 = vector.broadcast %4 : vector<1x512xf32> to vector<8x512xf32>
    %12 = arith.addf %10, %11 : vector<8x512xf32>
    %13 = vector.extract_strided_slice %12 {offsets = [0, 0], sizes = [8, 128], strides = [1, 1]} : vector<8x512xf32> to vector<8x128xf32>
    %14 = arith.negf %13 : vector<8x128xf32>
    %15 = math.exp %14 : vector<8x128xf32>
    %cst_9 = arith.constant 1.000000e+00 : f32
    %16 = vector.broadcast %cst_9 : f32 to vector<8x128xf32>
    %17 = arith.addf %16, %15 : vector<8x128xf32>
    %18 = arith.divf %16, %17 : vector<8x128xf32>
    %19 = vector.extract_strided_slice %12 {offsets = [0, 128], sizes = [8, 128], strides = [1, 1]} : vector<8x512xf32> to vector<8x128xf32>
    %20 = arith.negf %19 : vector<8x128xf32>
    %21 = math.exp %20 : vector<8x128xf32>
    %cst_10 = arith.constant 1.000000e+00 : f32
    %22 = vector.broadcast %cst_10 : f32 to vector<8x128xf32>
    %23 = arith.addf %22, %21 : vector<8x128xf32>
    %24 = arith.divf %22, %23 : vector<8x128xf32>
    %25 = vector.extract_strided_slice %12 {offsets = [0, 256], sizes = [8, 128], strides = [1, 1]} : vector<8x512xf32> to vector<8x128xf32>
    %26 = math.tanh %25 : vector<8x128xf32>
    %27 = vector.extract_strided_slice %12 {offsets = [0, 384], sizes = [8, 128], strides = [1, 1]} : vector<8x512xf32> to vector<8x128xf32>
    %28 = arith.negf %27 : vector<8x128xf32>
    %29 = math.exp %28 : vector<8x128xf32>
    %cst_11 = arith.constant 1.000000e+00 : f32
    %30 = vector.broadcast %cst_11 : f32 to vector<8x128xf32>
    %31 = arith.addf %30, %29 : vector<8x128xf32>
    %32 = arith.divf %30, %31 : vector<8x128xf32>
    %c0_12 = arith.constant 0 : index
    %c0_13 = arith.constant 0 : index
    %33 = vector.load %arg6[%c0_12, %c0_13] : memref<8x128xf32, #tpu.memory_space<vmem>>, vector<8x128xf32>
    %34 = arith.mulf %24, %33 : vector<8x128xf32>
    %35 = arith.mulf %18, %26 : vector<8x128xf32>
    %36 = arith.addf %34, %35 : vector<8x128xf32>
    %37 = math.tanh %36 : vector<8x128xf32>
    %38 = arith.mulf %32, %37 : vector<8x128xf32>
    %c0_14 = arith.constant 0 : index
    %c0_15 = arith.constant 0 : index
    %39 = vector.load %arg6[%c0_14, %c0_15] : memref<8x128xf32, #tpu.memory_space<vmem>>, vector<8x128xf32>
    tpu.vector_store %arg6[%c0_14, %c0_15], %36 {strides = array<i32>} : memref<8x128xf32, #tpu.memory_space<vmem>>, vector<8x128xf32>,
    %c0_16 = arith.constant 0 : index
    %c0_17 = arith.constant 0 : index
    %40 = vector.load %arg5[%c0_16, %c0_17] : memref<8x128xf32, #tpu.memory_space<vmem>>, vector<8x128xf32>
    tpu.vector_store %arg5[%c0_16, %c0_17], %38 {strides = array<i32>} : memref<8x128xf32, #tpu.memory_space<vmem>>, vector<8x128xf32>,
    %41 = arith.index_cast %c0_i32_4 : i32 to index
    %c0_18 = arith.constant 0 : index
    %c0_19 = arith.constant 0 : index
    %42 = vector.load %arg4[%41, %c0_18, %c0_19] : memref<8x8x128xf32, #tpu.memory_space<vmem>>, vector<1x8x128xf32>
    %43 = vector.shape_cast %42 : vector<1x8x128xf32> to vector<8x128xf32>
    %44 = vector.shape_cast %38 : vector<8x128xf32> to vector<1x8x128xf32>
    tpu.vector_store %arg4[%41, %c0_18, %c0_19], %44 {strides = array<i32>} : memref<8x8x128xf32, #tpu.memory_space<vmem>>, vector<1x8x128xf32>,
    %c1_i32 = arith.constant 1 : i32
    %45 = arith.index_cast %c1_i32 : i32 to index
    %c0_20 = arith.constant 0 : index
    %c0_21 = arith.constant 0 : index
    %46 = vector.load %arg1[%45, %c0_20, %c0_21] : memref<8x8x128xf32, #tpu.memory_space<vmem>>, vector<1x8x128xf32>
    %47 = vector.shape_cast %46 : vector<1x8x128xf32> to vector<8x128xf32>
    %c0_22 = arith.constant 0 : index
    %c0_23 = arith.constant 0 : index
    %48 = vector.load %arg5[%c0_22, %c0_23] : memref<8x128xf32, #tpu.memory_space<vmem>>, vector<8x128xf32>
    %49 = tpu.concatenate %47, %48 in 1 : vector<8x128xf32>, vector<8x128xf32> -> vector<8x256xf32>
    %cst_24 = arith.constant dense<0.000000e+00> : vector<8x512xf32>
    %50 = tpu.matmul %49, %3, %cst_24 {dimension_numbers = #tpu.dot_dimension_numbers<[1], [0], [0], [1], [0, 0, 1, 1], [], []>} : vector<8x256xf32>, vector<256x512xf32>, vector<8x512xf32> -> vector<8x512xf32>
    %51 = vector.broadcast %4 : vector<1x512xf32> to vector<8x512xf32>
    %52 = arith.addf %50, %51 : vector<8x512xf32>
    %53 = vector.extract_strided_slice %52 {offsets = [0, 0], sizes = [8, 128], strides = [1, 1]} : vector<8x512xf32> to vector<8x128xf32>
    %54 = arith.negf %53 : vector<8x128xf32>
    %55 = math.exp %54 : vector<8x128xf32>
    %cst_25 = arith.constant 1.000000e+00 : f32
    %56 = vector.broadcast %cst_25 : f32 to vector<8x128xf32>
    %57 = arith.addf %56, %55 : vector<8x128xf32>
    %58 = arith.divf %56, %57 : vector<8x128xf32>
    %59 = vector.extract_strided_slice %52 {offsets = [0, 128], sizes = [8, 128], strides = [1, 1]} : vector<8x512xf32> to vector<8x128xf32>
    %60 = arith.negf %59 : vector<8x128xf32>
    %61 = math.exp %60 : vector<8x128xf32>
    %cst_26 = arith.constant 1.000000e+00 : f32
    %62 = vector.broadcast %cst_26 : f32 to vector<8x128xf32>
    %63 = arith.addf %62, %61 : vector<8x128xf32>
    %64 = arith.divf %62, %63 : vector<8x128xf32>
    %65 = vector.extract_strided_slice %52 {offsets = [0, 256], sizes = [8, 128], strides = [1, 1]} : vector<8x512xf32> to vector<8x128xf32>
    %66 = math.tanh %65 : vector<8x128xf32>
    %67 = vector.extract_strided_slice %52 {offsets = [0, 384], sizes = [8, 128], strides = [1, 1]} : vector<8x512xf32> to vector<8x128xf32>
    %68 = arith.negf %67 : vector<8x128xf32>
    %69 = math.exp %68 : vector<8x128xf32>
    %cst_27 = arith.constant 1.000000e+00 : f32
    %70 = vector.broadcast %cst_27 : f32 to vector<8x128xf32>
    %71 = arith.addf %70, %69 : vector<8x128xf32>
    %72 = arith.divf %70, %71 : vector<8x128xf32>
    %c0_28 = arith.constant 0 : index
    %c0_29 = arith.constant 0 : index
    %73 = vector.load %arg6[%c0_28, %c0_29] : memref<8x128xf32, #tpu.memory_space<vmem>>, vector<8x128xf32>
    %74 = arith.mulf %64, %73 : vector<8x128xf32>
    %75 = arith.mulf %58, %66 : vector<8x128xf32>
    %76 = arith.addf %74, %75 : vector<8x128xf32>
    %77 = math.tanh %76 : vector<8x128xf32>
    %78 = arith.mulf %72, %77 : vector<8x128xf32>
    %c0_30 = arith.constant 0 : index
    %c0_31 = arith.constant 0 : index
    %79 = vector.load %arg6[%c0_30, %c0_31] : memref<8x128xf32, #tpu.memory_space<vmem>>, vector<8x128xf32>
    tpu.vector_store %arg6[%c0_30, %c0_31], %76 {strides = array<i32>} : memref<8x128xf32, #tpu.memory_space<vmem>>, vector<8x128xf32>,
    %c0_32 = arith.constant 0 : index
    %c0_33 = arith.constant 0 : index
    %80 = vector.load %arg5[%c0_32, %c0_33] : memref<8x128xf32, #tpu.memory_space<vmem>>, vector<8x128xf32>
    tpu.vector_store %arg5[%c0_32, %c0_33], %78 {strides = array<i32>} : memref<8x128xf32, #tpu.memory_space<vmem>>, vector<8x128xf32>,
    %81 = arith.index_cast %c1_i32 : i32 to index
    %c0_34 = arith.constant 0 : index
    %c0_35 = arith.constant 0 : index
    %82 = vector.load %arg4[%81, %c0_34, %c0_35] : memref<8x8x128xf32, #tpu.memory_space<vmem>>, vector<1x8x128xf32>
    %83 = vector.shape_cast %82 : vector<1x8x128xf32> to vector<8x128xf32>
    %84 = vector.shape_cast %78 : vector<8x128xf32> to vector<1x8x128xf32>
    tpu.vector_store %arg4[%81, %c0_34, %c0_35], %84 {strides = array<i32>} : memref<8x8x128xf32, #tpu.memory_space<vmem>>, vector<1x8x128xf32>,
    %c2_i32 = arith.constant 2 : i32
    %85 = arith.index_cast %c2_i32 : i32 to index
    %c0_36 = arith.constant 0 : index
    %c0_37 = arith.constant 0 : index
    %86 = vector.load %arg1[%85, %c0_36, %c0_37] : memref<8x8x128xf32, #tpu.memory_space<vmem>>, vector<1x8x128xf32>
    %87 = vector.shape_cast %86 : vector<1x8x128xf32> to vector<8x128xf32>
    %c0_38 = arith.constant 0 : index
    %c0_39 = arith.constant 0 : index
    %88 = vector.load %arg5[%c0_38, %c0_39] : memref<8x128xf32, #tpu.memory_space<vmem>>, vector<8x128xf32>
    %89 = tpu.concatenate %87, %88 in 1 : vector<8x128xf32>, vector<8x128xf32> -> vector<8x256xf32>
    %cst_40 = arith.constant dense<0.000000e+00> : vector<8x512xf32>
    %90 = tpu.matmul %89, %3, %cst_40 {dimension_numbers = #tpu.dot_dimension_numbers<[1], [0], [0], [1], [0, 0, 1, 1], [], []>} : vector<8x256xf32>, vector<256x512xf32>, vector<8x512xf32> -> vector<8x512xf32>
    %91 = vector.broadcast %4 : vector<1x512xf32> to vector<8x512xf32>
    %92 = arith.addf %90, %91 : vector<8x512xf32>
    %93 = vector.extract_strided_slice %92 {offsets = [0, 0], sizes = [8, 128], strides = [1, 1]} : vector<8x512xf32> to vector<8x128xf32>
    %94 = arith.negf %93 : vector<8x128xf32>
    %95 = math.exp %94 : vector<8x128xf32>
    %cst_41 = arith.constant 1.000000e+00 : f32
    %96 = vector.broadcast %cst_41 : f32 to vector<8x128xf32>
    %97 = arith.addf %96, %95 : vector<8x128xf32>
    %98 = arith.divf %96, %97 : vector<8x128xf32>
    %99 = vector.extract_strided_slice %92 {offsets = [0, 128], sizes = [8, 128], strides = [1, 1]} : vector<8x512xf32> to vector<8x128xf32>
    %100 = arith.negf %99 : vector<8x128xf32>
    %101 = math.exp %100 : vector<8x128xf32>
    %cst_42 = arith.constant 1.000000e+00 : f32
    %102 = vector.broadcast %cst_42 : f32 to vector<8x128xf32>
    %103 = arith.addf %102, %101 : vector<8x128xf32>
    %104 = arith.divf %102, %103 : vector<8x128xf32>
    %105 = vector.extract_strided_slice %92 {offsets = [0, 256], sizes = [8, 128], strides = [1, 1]} : vector<8x512xf32> to vector<8x128xf32>
    %106 = math.tanh %105 : vector<8x128xf32>
    %107 = vector.extract_strided_slice %92 {offsets = [0, 384], sizes = [8, 128], strides = [1, 1]} : vector<8x512xf32> to vector<8x128xf32>
    %108 = arith.negf %107 : vector<8x128xf32>
    %109 = math.exp %108 : vector<8x128xf32>
    %cst_43 = arith.constant 1.000000e+00 : f32
    %110 = vector.broadcast %cst_43 : f32 to vector<8x128xf32>
    %111 = arith.addf %110, %109 : vector<8x128xf32>
    %112 = arith.divf %110, %111 : vector<8x128xf32>
    %c0_44 = arith.constant 0 : index
    %c0_45 = arith.constant 0 : index
    %113 = vector.load %arg6[%c0_44, %c0_45] : memref<8x128xf32, #tpu.memory_space<vmem>>, vector<8x128xf32>
    %114 = arith.mulf %104, %113 : vector<8x128xf32>
    %115 = arith.mulf %98, %106 : vector<8x128xf32>
    %116 = arith.addf %114, %115 : vector<8x128xf32>
    %117 = math.tanh %116 : vector<8x128xf32>
    %118 = arith.mulf %112, %117 : vector<8x128xf32>
    %c0_46 = arith.constant 0 : index
    %c0_47 = arith.constant 0 : index
    %119 = vector.load %arg6[%c0_46, %c0_47] : memref<8x128xf32, #tpu.memory_space<vmem>>, vector<8x128xf32>
    tpu.vector_store %arg6[%c0_46, %c0_47], %116 {strides = array<i32>} : memref<8x128xf32, #tpu.memory_space<vmem>>, vector<8x128xf32>,
    %c0_48 = arith.constant 0 : index
    %c0_49 = arith.constant 0 : index
    %120 = vector.load %arg5[%c0_48, %c0_49] : memref<8x128xf32, #tpu.memory_space<vmem>>, vector<8x128xf32>
    tpu.vector_store %arg5[%c0_48, %c0_49], %118 {strides = array<i32>} : memref<8x128xf32, #tpu.memory_space<vmem>>, vector<8x128xf32>,
    %121 = arith.index_cast %c2_i32 : i32 to index
    %c0_50 = arith.constant 0 : index
    %c0_51 = arith.constant 0 : index
    %122 = vector.load %arg4[%121, %c0_50, %c0_51] : memref<8x8x128xf32, #tpu.memory_space<vmem>>, vector<1x8x128xf32>
    %123 = vector.shape_cast %122 : vector<1x8x128xf32> to vector<8x128xf32>
    %124 = vector.shape_cast %118 : vector<8x128xf32> to vector<1x8x128xf32>
    tpu.vector_store %arg4[%121, %c0_50, %c0_51], %124 {strides = array<i32>} : memref<8x8x128xf32, #tpu.memory_space<vmem>>, vector<1x8x128xf32>,
    %c3_i32 = arith.constant 3 : i32
    %125 = arith.index_cast %c3_i32 : i32 to index
    %c0_52 = arith.constant 0 : index
    %c0_53 = arith.constant 0 : index
    %126 = vector.load %arg1[%125, %c0_52, %c0_53] : memref<8x8x128xf32, #tpu.memory_space<vmem>>, vector<1x8x128xf32>
    %127 = vector.shape_cast %126 : vector<1x8x128xf32> to vector<8x128xf32>
    %c0_54 = arith.constant 0 : index
    %c0_55 = arith.constant 0 : index
    %128 = vector.load %arg5[%c0_54, %c0_55] : memref<8x128xf32, #tpu.memory_space<vmem>>, vector<8x128xf32>
    %129 = tpu.concatenate %127, %128 in 1 : vector<8x128xf32>, vector<8x128xf32> -> vector<8x256xf32>
    %cst_56 = arith.constant dense<0.000000e+00> : vector<8x512xf32>
    %130 = tpu.matmul %129, %3, %cst_56 {dimension_numbers = #tpu.dot_dimension_numbers<[1], [0], [0], [1], [0, 0, 1, 1], [], []>} : vector<8x256xf32>, vector<256x512xf32>, vector<8x512xf32> -> vector<8x512xf32>
    %131 = vector.broadcast %4 : vector<1x512xf32> to vector<8x512xf32>
    %132 = arith.addf %130, %131 : vector<8x512xf32>
    %133 = vector.extract_strided_slice %132 {offsets = [0, 0], sizes = [8, 128], strides = [1, 1]} : vector<8x512xf32> to vector<8x128xf32>
    %134 = arith.negf %133 : vector<8x128xf32>
    %135 = math.exp %134 : vector<8x128xf32>
    %cst_57 = arith.constant 1.000000e+00 : f32
    %136 = vector.broadcast %cst_57 : f32 to vector<8x128xf32>
    %137 = arith.addf %136, %135 : vector<8x128xf32>
    %138 = arith.divf %136, %137 : vector<8x128xf32>
    %139 = vector.extract_strided_slice %132 {offsets = [0, 128], sizes = [8, 128], strides = [1, 1]} : vector<8x512xf32> to vector<8x128xf32>
    %140 = arith.negf %139 : vector<8x128xf32>
    %141 = math.exp %140 : vector<8x128xf32>
    %cst_58 = arith.constant 1.000000e+00 : f32
    %142 = vector.broadcast %cst_58 : f32 to vector<8x128xf32>
    %143 = arith.addf %142, %141 : vector<8x128xf32>
    %144 = arith.divf %142, %143 : vector<8x128xf32>
    %145 = vector.extract_strided_slice %132 {offsets = [0, 256], sizes = [8, 128], strides = [1, 1]} : vector<8x512xf32> to vector<8x128xf32>
    %146 = math.tanh %145 : vector<8x128xf32>
    %147 = vector.extract_strided_slice %132 {offsets = [0, 384], sizes = [8, 128], strides = [1, 1]} : vector<8x512xf32> to vector<8x128xf32>
    %148 = arith.negf %147 : vector<8x128xf32>
    %149 = math.exp %148 : vector<8x128xf32>
    %cst_59 = arith.constant 1.000000e+00 : f32
    %150 = vector.broadcast %cst_59 : f32 to vector<8x128xf32>
    %151 = arith.addf %150, %149 : vector<8x128xf32>
    %152 = arith.divf %150, %151 : vector<8x128xf32>
    %c0_60 = arith.constant 0 : index
    %c0_61 = arith.constant 0 : index
    %153 = vector.load %arg6[%c0_60, %c0_61] : memref<8x128xf32, #tpu.memory_space<vmem>>, vector<8x128xf32>
    %154 = arith.mulf %144, %153 : vector<8x128xf32>
    %155 = arith.mulf %138, %146 : vector<8x128xf32>
    %156 = arith.addf %154, %155 : vector<8x128xf32>
    %157 = math.tanh %156 : vector<8x128xf32>
    %158 = arith.mulf %152, %157 : vector<8x128xf32>
    %c0_62 = arith.constant 0 : index
    %c0_63 = arith.constant 0 : index
    %159 = vector.load %arg6[%c0_62, %c0_63] : memref<8x128xf32, #tpu.memory_space<vmem>>, vector<8x128xf32>
    tpu.vector_store %arg6[%c0_62, %c0_63], %156 {strides = array<i32>} : memref<8x128xf32, #tpu.memory_space<vmem>>, vector<8x128xf32>,
    %c0_64 = arith.constant 0 : index
    %c0_65 = arith.constant 0 : index
    %160 = vector.load %arg5[%c0_64, %c0_65] : memref<8x128xf32, #tpu.memory_space<vmem>>, vector<8x128xf32>
    tpu.vector_store %arg5[%c0_64, %c0_65], %158 {strides = array<i32>} : memref<8x128xf32, #tpu.memory_space<vmem>>, vector<8x128xf32>,
    %161 = arith.index_cast %c3_i32 : i32 to index
    %c0_66 = arith.constant 0 : index
    %c0_67 = arith.constant 0 : index
    %162 = vector.load %arg4[%161, %c0_66, %c0_67] : memref<8x8x128xf32, #tpu.memory_space<vmem>>, vector<1x8x128xf32>
    %163 = vector.shape_cast %162 : vector<1x8x128xf32> to vector<8x128xf32>
    %164 = vector.shape_cast %158 : vector<8x128xf32> to vector<1x8x128xf32>
    tpu.vector_store %arg4[%161, %c0_66, %c0_67], %164 {strides = array<i32>} : memref<8x8x128xf32, #tpu.memory_space<vmem>>, vector<1x8x128xf32>,
    %c4_i32 = arith.constant 4 : i32
    %165 = arith.index_cast %c4_i32 : i32 to index
    %c0_68 = arith.constant 0 : index
    %c0_69 = arith.constant 0 : index
    %166 = vector.load %arg1[%165, %c0_68, %c0_69] : memref<8x8x128xf32, #tpu.memory_space<vmem>>, vector<1x8x128xf32>
    %167 = vector.shape_cast %166 : vector<1x8x128xf32> to vector<8x128xf32>
    %c0_70 = arith.constant 0 : index
    %c0_71 = arith.constant 0 : index
    %168 = vector.load %arg5[%c0_70, %c0_71] : memref<8x128xf32, #tpu.memory_space<vmem>>, vector<8x128xf32>
    %169 = tpu.concatenate %167, %168 in 1 : vector<8x128xf32>, vector<8x128xf32> -> vector<8x256xf32>
    %cst_72 = arith.constant dense<0.000000e+00> : vector<8x512xf32>
    %170 = tpu.matmul %169, %3, %cst_72 {dimension_numbers = #tpu.dot_dimension_numbers<[1], [0], [0], [1], [0, 0, 1, 1], [], []>} : vector<8x256xf32>, vector<256x512xf32>, vector<8x512xf32> -> vector<8x512xf32>
    %171 = vector.broadcast %4 : vector<1x512xf32> to vector<8x512xf32>
    %172 = arith.addf %170, %171 : vector<8x512xf32>
    %173 = vector.extract_strided_slice %172 {offsets = [0, 0], sizes = [8, 128], strides = [1, 1]} : vector<8x512xf32> to vector<8x128xf32>
    %174 = arith.negf %173 : vector<8x128xf32>
    %175 = math.exp %174 : vector<8x128xf32>
    %cst_73 = arith.constant 1.000000e+00 : f32
    %176 = vector.broadcast %cst_73 : f32 to vector<8x128xf32>
    %177 = arith.addf %176, %175 : vector<8x128xf32>
    %178 = arith.divf %176, %177 : vector<8x128xf32>
    %179 = vector.extract_strided_slice %172 {offsets = [0, 128], sizes = [8, 128], strides = [1, 1]} : vector<8x512xf32> to vector<8x128xf32>
    %180 = arith.negf %179 : vector<8x128xf32>
    %181 = math.exp %180 : vector<8x128xf32>
    %cst_74 = arith.constant 1.000000e+00 : f32
    %182 = vector.broadcast %cst_74 : f32 to vector<8x128xf32>
    %183 = arith.addf %182, %181 : vector<8x128xf32>
    %184 = arith.divf %182, %183 : vector<8x128xf32>
    %185 = vector.extract_strided_slice %172 {offsets = [0, 256], sizes = [8, 128], strides = [1, 1]} : vector<8x512xf32> to vector<8x128xf32>
    %186 = math.tanh %185 : vector<8x128xf32>
    %187 = vector.extract_strided_slice %172 {offsets = [0, 384], sizes = [8, 128], strides = [1, 1]} : vector<8x512xf32> to vector<8x128xf32>
    %188 = arith.negf %187 : vector<8x128xf32>
    %189 = math.exp %188 : vector<8x128xf32>
    %cst_75 = arith.constant 1.000000e+00 : f32
    %190 = vector.broadcast %cst_75 : f32 to vector<8x128xf32>
    %191 = arith.addf %190, %189 : vector<8x128xf32>
    %192 = arith.divf %190, %191 : vector<8x128xf32>
    %c0_76 = arith.constant 0 : index
    %c0_77 = arith.constant 0 : index
    %193 = vector.load %arg6[%c0_76, %c0_77] : memref<8x128xf32, #tpu.memory_space<vmem>>, vector<8x128xf32>
    %194 = arith.mulf %184, %193 : vector<8x128xf32>
    %195 = arith.mulf %178, %186 : vector<8x128xf32>
    %196 = arith.addf %194, %195 : vector<8x128xf32>
    %197 = math.tanh %196 : vector<8x128xf32>
    %198 = arith.mulf %192, %197 : vector<8x128xf32>
    %c0_78 = arith.constant 0 : index
    %c0_79 = arith.constant 0 : index
    %199 = vector.load %arg6[%c0_78, %c0_79] : memref<8x128xf32, #tpu.memory_space<vmem>>, vector<8x128xf32>
    tpu.vector_store %arg6[%c0_78, %c0_79], %196 {strides = array<i32>} : memref<8x128xf32, #tpu.memory_space<vmem>>, vector<8x128xf32>,
    %c0_80 = arith.constant 0 : index
    %c0_81 = arith.constant 0 : index
    %200 = vector.load %arg5[%c0_80, %c0_81] : memref<8x128xf32, #tpu.memory_space<vmem>>, vector<8x128xf32>
    tpu.vector_store %arg5[%c0_80, %c0_81], %198 {strides = array<i32>} : memref<8x128xf32, #tpu.memory_space<vmem>>, vector<8x128xf32>,
    %201 = arith.index_cast %c4_i32 : i32 to index
    %c0_82 = arith.constant 0 : index
    %c0_83 = arith.constant 0 : index
    %202 = vector.load %arg4[%201, %c0_82, %c0_83] : memref<8x8x128xf32, #tpu.memory_space<vmem>>, vector<1x8x128xf32>
    %203 = vector.shape_cast %202 : vector<1x8x128xf32> to vector<8x128xf32>
    %204 = vector.shape_cast %198 : vector<8x128xf32> to vector<1x8x128xf32>
    tpu.vector_store %arg4[%201, %c0_82, %c0_83], %204 {strides = array<i32>} : memref<8x8x128xf32, #tpu.memory_space<vmem>>, vector<1x8x128xf32>,
    %c5_i32 = arith.constant 5 : i32
    %205 = arith.index_cast %c5_i32 : i32 to index
    %c0_84 = arith.constant 0 : index
    %c0_85 = arith.constant 0 : index
    %206 = vector.load %arg1[%205, %c0_84, %c0_85] : memref<8x8x128xf32, #tpu.memory_space<vmem>>, vector<1x8x128xf32>
    %207 = vector.shape_cast %206 : vector<1x8x128xf32> to vector<8x128xf32>
    %c0_86 = arith.constant 0 : index
    %c0_87 = arith.constant 0 : index
    %208 = vector.load %arg5[%c0_86, %c0_87] : memref<8x128xf32, #tpu.memory_space<vmem>>, vector<8x128xf32>
    %209 = tpu.concatenate %207, %208 in 1 : vector<8x128xf32>, vector<8x128xf32> -> vector<8x256xf32>
    %cst_88 = arith.constant dense<0.000000e+00> : vector<8x512xf32>
    %210 = tpu.matmul %209, %3, %cst_88 {dimension_numbers = #tpu.dot_dimension_numbers<[1], [0], [0], [1], [0, 0, 1, 1], [], []>} : vector<8x256xf32>, vector<256x512xf32>, vector<8x512xf32> -> vector<8x512xf32>
    %211 = vector.broadcast %4 : vector<1x512xf32> to vector<8x512xf32>
    %212 = arith.addf %210, %211 : vector<8x512xf32>
    %213 = vector.extract_strided_slice %212 {offsets = [0, 0], sizes = [8, 128], strides = [1, 1]} : vector<8x512xf32> to vector<8x128xf32>
    %214 = arith.negf %213 : vector<8x128xf32>
    %215 = math.exp %214 : vector<8x128xf32>
    %cst_89 = arith.constant 1.000000e+00 : f32
    %216 = vector.broadcast %cst_89 : f32 to vector<8x128xf32>
    %217 = arith.addf %216, %215 : vector<8x128xf32>
    %218 = arith.divf %216, %217 : vector<8x128xf32>
    %219 = vector.extract_strided_slice %212 {offsets = [0, 128], sizes = [8, 128], strides = [1, 1]} : vector<8x512xf32> to vector<8x128xf32>
    %220 = arith.negf %219 : vector<8x128xf32>
    %221 = math.exp %220 : vector<8x128xf32>
    %cst_90 = arith.constant 1.000000e+00 : f32
    %222 = vector.broadcast %cst_90 : f32 to vector<8x128xf32>
    %223 = arith.addf %222, %221 : vector<8x128xf32>
    %224 = arith.divf %222, %223 : vector<8x128xf32>
    %225 = vector.extract_strided_slice %212 {offsets = [0, 256], sizes = [8, 128], strides = [1, 1]} : vector<8x512xf32> to vector<8x128xf32>
    %226 = math.tanh %225 : vector<8x128xf32>
    %227 = vector.extract_strided_slice %212 {offsets = [0, 384], sizes = [8, 128], strides = [1, 1]} : vector<8x512xf32> to vector<8x128xf32>
    %228 = arith.negf %227 : vector<8x128xf32>
    %229 = math.exp %228 : vector<8x128xf32>
    %cst_91 = arith.constant 1.000000e+00 : f32
    %230 = vector.broadcast %cst_91 : f32 to vector<8x128xf32>
    %231 = arith.addf %230, %229 : vector<8x128xf32>
    %232 = arith.divf %230, %231 : vector<8x128xf32>
    %c0_92 = arith.constant 0 : index
    %c0_93 = arith.constant 0 : index
    %233 = vector.load %arg6[%c0_92, %c0_93] : memref<8x128xf32, #tpu.memory_space<vmem>>, vector<8x128xf32>
    %234 = arith.mulf %224, %233 : vector<8x128xf32>
    %235 = arith.mulf %218, %226 : vector<8x128xf32>
    %236 = arith.addf %234, %235 : vector<8x128xf32>
    %237 = math.tanh %236 : vector<8x128xf32>
    %238 = arith.mulf %232, %237 : vector<8x128xf32>
    %c0_94 = arith.constant 0 : index
    %c0_95 = arith.constant 0 : index
    %239 = vector.load %arg6[%c0_94, %c0_95] : memref<8x128xf32, #tpu.memory_space<vmem>>, vector<8x128xf32>
    tpu.vector_store %arg6[%c0_94, %c0_95], %236 {strides = array<i32>} : memref<8x128xf32, #tpu.memory_space<vmem>>, vector<8x128xf32>,
    %c0_96 = arith.constant 0 : index
    %c0_97 = arith.constant 0 : index
    %240 = vector.load %arg5[%c0_96, %c0_97] : memref<8x128xf32, #tpu.memory_space<vmem>>, vector<8x128xf32>
    tpu.vector_store %arg5[%c0_96, %c0_97], %238 {strides = array<i32>} : memref<8x128xf32, #tpu.memory_space<vmem>>, vector<8x128xf32>,
    %241 = arith.index_cast %c5_i32 : i32 to index
    %c0_98 = arith.constant 0 : index
    %c0_99 = arith.constant 0 : index
    %242 = vector.load %arg4[%241, %c0_98, %c0_99] : memref<8x8x128xf32, #tpu.memory_space<vmem>>, vector<1x8x128xf32>
    %243 = vector.shape_cast %242 : vector<1x8x128xf32> to vector<8x128xf32>
    %244 = vector.shape_cast %238 : vector<8x128xf32> to vector<1x8x128xf32>
    tpu.vector_store %arg4[%241, %c0_98, %c0_99], %244 {strides = array<i32>} : memref<8x8x128xf32, #tpu.memory_space<vmem>>, vector<1x8x128xf32>,
    %c6_i32 = arith.constant 6 : i32
    %245 = arith.index_cast %c6_i32 : i32 to index
    %c0_100 = arith.constant 0 : index
    %c0_101 = arith.constant 0 : index
    %246 = vector.load %arg1[%245, %c0_100, %c0_101] : memref<8x8x128xf32, #tpu.memory_space<vmem>>, vector<1x8x128xf32>
    %247 = vector.shape_cast %246 : vector<1x8x128xf32> to vector<8x128xf32>
    %c0_102 = arith.constant 0 : index
    %c0_103 = arith.constant 0 : index
    %248 = vector.load %arg5[%c0_102, %c0_103] : memref<8x128xf32, #tpu.memory_space<vmem>>, vector<8x128xf32>
    %249 = tpu.concatenate %247, %248 in 1 : vector<8x128xf32>, vector<8x128xf32> -> vector<8x256xf32>
    %cst_104 = arith.constant dense<0.000000e+00> : vector<8x512xf32>
    %250 = tpu.matmul %249, %3, %cst_104 {dimension_numbers = #tpu.dot_dimension_numbers<[1], [0], [0], [1], [0, 0, 1, 1], [], []>} : vector<8x256xf32>, vector<256x512xf32>, vector<8x512xf32> -> vector<8x512xf32>
    %251 = vector.broadcast %4 : vector<1x512xf32> to vector<8x512xf32>
    %252 = arith.addf %250, %251 : vector<8x512xf32>
    %253 = vector.extract_strided_slice %252 {offsets = [0, 0], sizes = [8, 128], strides = [1, 1]} : vector<8x512xf32> to vector<8x128xf32>
    %254 = arith.negf %253 : vector<8x128xf32>
    %255 = math.exp %254 : vector<8x128xf32>
    %cst_105 = arith.constant 1.000000e+00 : f32
    %256 = vector.broadcast %cst_105 : f32 to vector<8x128xf32>
    %257 = arith.addf %256, %255 : vector<8x128xf32>
    %258 = arith.divf %256, %257 : vector<8x128xf32>
    %259 = vector.extract_strided_slice %252 {offsets = [0, 128], sizes = [8, 128], strides = [1, 1]} : vector<8x512xf32> to vector<8x128xf32>
    %260 = arith.negf %259 : vector<8x128xf32>
    %261 = math.exp %260 : vector<8x128xf32>
    %cst_106 = arith.constant 1.000000e+00 : f32
    %262 = vector.broadcast %cst_106 : f32 to vector<8x128xf32>
    %263 = arith.addf %262, %261 : vector<8x128xf32>
    %264 = arith.divf %262, %263 : vector<8x128xf32>
    %265 = vector.extract_strided_slice %252 {offsets = [0, 256], sizes = [8, 128], strides = [1, 1]} : vector<8x512xf32> to vector<8x128xf32>
    %266 = math.tanh %265 : vector<8x128xf32>
    %267 = vector.extract_strided_slice %252 {offsets = [0, 384], sizes = [8, 128], strides = [1, 1]} : vector<8x512xf32> to vector<8x128xf32>
    %268 = arith.negf %267 : vector<8x128xf32>
    %269 = math.exp %268 : vector<8x128xf32>
    %cst_107 = arith.constant 1.000000e+00 : f32
    %270 = vector.broadcast %cst_107 : f32 to vector<8x128xf32>
    %271 = arith.addf %270, %269 : vector<8x128xf32>
    %272 = arith.divf %270, %271 : vector<8x128xf32>
    %c0_108 = arith.constant 0 : index
    %c0_109 = arith.constant 0 : index
    %273 = vector.load %arg6[%c0_108, %c0_109] : memref<8x128xf32, #tpu.memory_space<vmem>>, vector<8x128xf32>
    %274 = arith.mulf %264, %273 : vector<8x128xf32>
    %275 = arith.mulf %258, %266 : vector<8x128xf32>
    %276 = arith.addf %274, %275 : vector<8x128xf32>
    %277 = math.tanh %276 : vector<8x128xf32>
    %278 = arith.mulf %272, %277 : vector<8x128xf32>
    %c0_110 = arith.constant 0 : index
    %c0_111 = arith.constant 0 : index
    %279 = vector.load %arg6[%c0_110, %c0_111] : memref<8x128xf32, #tpu.memory_space<vmem>>, vector<8x128xf32>
    tpu.vector_store %arg6[%c0_110, %c0_111], %276 {strides = array<i32>} : memref<8x128xf32, #tpu.memory_space<vmem>>, vector<8x128xf32>,
    %c0_112 = arith.constant 0 : index
    %c0_113 = arith.constant 0 : index
    %280 = vector.load %arg5[%c0_112, %c0_113] : memref<8x128xf32, #tpu.memory_space<vmem>>, vector<8x128xf32>
    tpu.vector_store %arg5[%c0_112, %c0_113], %278 {strides = array<i32>} : memref<8x128xf32, #tpu.memory_space<vmem>>, vector<8x128xf32>,
    %281 = arith.index_cast %c6_i32 : i32 to index
    %c0_114 = arith.constant 0 : index
    %c0_115 = arith.constant 0 : index
    %282 = vector.load %arg4[%281, %c0_114, %c0_115] : memref<8x8x128xf32, #tpu.memory_space<vmem>>, vector<1x8x128xf32>
    %283 = vector.shape_cast %282 : vector<1x8x128xf32> to vector<8x128xf32>
    %284 = vector.shape_cast %278 : vector<8x128xf32> to vector<1x8x128xf32>
    tpu.vector_store %arg4[%281, %c0_114, %c0_115], %284 {strides = array<i32>} : memref<8x8x128xf32, #tpu.memory_space<vmem>>, vector<1x8x128xf32>,
    %c7_i32 = arith.constant 7 : i32
    %285 = arith.index_cast %c7_i32 : i32 to index
    %c0_116 = arith.constant 0 : index
    %c0_117 = arith.constant 0 : index
    %286 = vector.load %arg1[%285, %c0_116, %c0_117] : memref<8x8x128xf32, #tpu.memory_space<vmem>>, vector<1x8x128xf32>
    %287 = vector.shape_cast %286 : vector<1x8x128xf32> to vector<8x128xf32>
    %c0_118 = arith.constant 0 : index
    %c0_119 = arith.constant 0 : index
    %288 = vector.load %arg5[%c0_118, %c0_119] : memref<8x128xf32, #tpu.memory_space<vmem>>, vector<8x128xf32>
    %289 = tpu.concatenate %287, %288 in 1 : vector<8x128xf32>, vector<8x128xf32> -> vector<8x256xf32>
    %cst_120 = arith.constant dense<0.000000e+00> : vector<8x512xf32>
    %290 = tpu.matmul %289, %3, %cst_120 {dimension_numbers = #tpu.dot_dimension_numbers<[1], [0], [0], [1], [0, 0, 1, 1], [], []>} : vector<8x256xf32>, vector<256x512xf32>, vector<8x512xf32> -> vector<8x512xf32>
    %291 = vector.broadcast %4 : vector<1x512xf32> to vector<8x512xf32>
    %292 = arith.addf %290, %291 : vector<8x512xf32>
    %293 = vector.extract_strided_slice %292 {offsets = [0, 0], sizes = [8, 128], strides = [1, 1]} : vector<8x512xf32> to vector<8x128xf32>
    %294 = arith.negf %293 : vector<8x128xf32>
    %295 = math.exp %294 : vector<8x128xf32>
    %cst_121 = arith.constant 1.000000e+00 : f32
    %296 = vector.broadcast %cst_121 : f32 to vector<8x128xf32>
    %297 = arith.addf %296, %295 : vector<8x128xf32>
    %298 = arith.divf %296, %297 : vector<8x128xf32>
    %299 = vector.extract_strided_slice %292 {offsets = [0, 128], sizes = [8, 128], strides = [1, 1]} : vector<8x512xf32> to vector<8x128xf32>
    %300 = arith.negf %299 : vector<8x128xf32>
    %301 = math.exp %300 : vector<8x128xf32>
    %cst_122 = arith.constant 1.000000e+00 : f32
    %302 = vector.broadcast %cst_122 : f32 to vector<8x128xf32>
    %303 = arith.addf %302, %301 : vector<8x128xf32>
    %304 = arith.divf %302, %303 : vector<8x128xf32>
    %305 = vector.extract_strided_slice %292 {offsets = [0, 256], sizes = [8, 128], strides = [1, 1]} : vector<8x512xf32> to vector<8x128xf32>
    %306 = math.tanh %305 : vector<8x128xf32>
    %307 = vector.extract_strided_slice %292 {offsets = [0, 384], sizes = [8, 128], strides = [1, 1]} : vector<8x512xf32> to vector<8x128xf32>
    %308 = arith.negf %307 : vector<8x128xf32>
    %309 = math.exp %308 : vector<8x128xf32>
    %cst_123 = arith.constant 1.000000e+00 : f32
    %310 = vector.broadcast %cst_123 : f32 to vector<8x128xf32>
    %311 = arith.addf %310, %309 : vector<8x128xf32>
    %312 = arith.divf %310, %311 : vector<8x128xf32>
    %c0_124 = arith.constant 0 : index
    %c0_125 = arith.constant 0 : index
    %313 = vector.load %arg6[%c0_124, %c0_125] : memref<8x128xf32, #tpu.memory_space<vmem>>, vector<8x128xf32>
    %314 = arith.mulf %304, %313 : vector<8x128xf32>
    %315 = arith.mulf %298, %306 : vector<8x128xf32>
    %316 = arith.addf %314, %315 : vector<8x128xf32>
    %317 = math.tanh %316 : vector<8x128xf32>
    %318 = arith.mulf %312, %317 : vector<8x128xf32>
    %c0_126 = arith.constant 0 : index
    %c0_127 = arith.constant 0 : index
    %319 = vector.load %arg6[%c0_126, %c0_127] : memref<8x128xf32, #tpu.memory_space<vmem>>, vector<8x128xf32>
    tpu.vector_store %arg6[%c0_126, %c0_127], %316 {strides = array<i32>} : memref<8x128xf32, #tpu.memory_space<vmem>>, vector<8x128xf32>,
    %c0_128 = arith.constant 0 : index
    %c0_129 = arith.constant 0 : index
    %320 = vector.load %arg5[%c0_128, %c0_129] : memref<8x128xf32, #tpu.memory_space<vmem>>, vector<8x128xf32>
    tpu.vector_store %arg5[%c0_128, %c0_129], %318 {strides = array<i32>} : memref<8x128xf32, #tpu.memory_space<vmem>>, vector<8x128xf32>,
    %321 = arith.index_cast %c7_i32 : i32 to index
    %c0_130 = arith.constant 0 : index
    %c0_131 = arith.constant 0 : index
    %322 = vector.load %arg4[%321, %c0_130, %c0_131] : memref<8x8x128xf32, #tpu.memory_space<vmem>>, vector<1x8x128xf32>
    %323 = vector.shape_cast %322 : vector<1x8x128xf32> to vector<8x128xf32>
    %324 = vector.shape_cast %318 : vector<8x128xf32> to vector<1x8x128xf32>
    tpu.vector_store %arg4[%321, %c0_130, %c0_131], %324 {strides = array<i32>} : memref<8x8x128xf32, #tpu.memory_space<vmem>>, vector<1x8x128xf32>,
    %c8_i32 = arith.constant 8 : i32
    return
  }
  func.func @transform_0(%arg0: i32) -> (i32, i32, i32) {
    %c0_i32 = arith.constant 0 : i32
    %c0_i32_0 = arith.constant 0 : i32
    %c0_i32_1 = arith.constant 0 : i32
    return %arg0, %c0_i32, %c0_i32_0 : i32, i32, i32
  }
  func.func @transform_1(%arg0: i32) -> (i32, i32) {
    %c0_i32 = arith.constant 0 : i32
    %c0_i32_0 = arith.constant 0 : i32
    %c0_i32_1 = arith.constant 0 : i32
    return %c0_i32, %c0_i32_0 : i32, i32
  }
  func.func @transform_2(%arg0: i32) -> (i32, i32) {
    %c0_i32 = arith.constant 0 : i32
    %c0_i32_0 = arith.constant 0 : i32
    %c0_i32_1 = arith.constant 0 : i32
    return %c0_i32, %c0_i32_0 : i32, i32
  }
  func.func @transform_3(%arg0: i32) -> (i32, i32, i32) {
    %c0_i32 = arith.constant 0 : i32
    %c0_i32_0 = arith.constant 0 : i32
    %c0_i32_1 = arith.constant 0 : i32
    return %arg0, %c0_i32, %c0_i32_0 : i32, i32, i32
  }
}

module attributes {stable_mosaic.version = 11 : i64} {
  func.func @_fc_kernel(%arg0: i32, %arg1: i32, %arg2: memref<64x128xf32, #tpu.memory_space<vmem>>, %arg3: memref<128x128xf32, #tpu.memory_space<vmem>>, %arg4: memref<1x128xf32, #tpu.memory_space<vmem>>, %arg5: memref<64x128xf32, #tpu.memory_space<vmem>>) attributes {dimension_semantics = [#tpu.dimension_semantics<parallel>, #tpu.dimension_semantics<parallel>], iteration_bounds = array<i64: 1, 1>, scalar_prefetch = 0 : i64, scratch_operands = 0 : i64, tpu.core_type = #tpu.core_type<tc>, window_params = [{transform_indices = @transform_0, window_bounds = array<i64: 64, 128>}, {transform_indices = @transform_1, window_bounds = array<i64: 128, 128>}, {transform_indices = @transform_2, window_bounds = array<i64: 1, 128>}, {transform_indices = @transform_3, window_bounds = array<i64: 64, 128>}]} {
    %c0 = arith.constant 0 : index
    %c0_0 = arith.constant 0 : index
    %0 = vector.load %arg2[%c0, %c0_0] : memref<64x128xf32, #tpu.memory_space<vmem>>, vector<64x128xf32>
    %c0_1 = arith.constant 0 : index
    %c0_2 = arith.constant 0 : index
    %1 = vector.load %arg3[%c0_1, %c0_2] : memref<128x128xf32, #tpu.memory_space<vmem>>, vector<128x128xf32>
    %cst = arith.constant dense<0.000000e+00> : vector<64x128xf32>
    %2 = tpu.matmul %0, %1, %cst {dimension_numbers = #tpu.dot_dimension_numbers<[1], [0], [0], [1], [0, 0, 1, 1], [], []>} : vector<64x128xf32>, vector<128x128xf32>, vector<64x128xf32> -> vector<64x128xf32>
    %c0_3 = arith.constant 0 : index
    %c0_4 = arith.constant 0 : index
    %3 = vector.load %arg4[%c0_3, %c0_4] : memref<1x128xf32, #tpu.memory_space<vmem>>, vector<1x128xf32>
    %4 = vector.broadcast %3 : vector<1x128xf32> to vector<64x128xf32>
    %5 = arith.addf %2, %4 : vector<64x128xf32>
    %c0_5 = arith.constant 0 : index
    %c0_6 = arith.constant 0 : index
    %6 = vector.load %arg5[%c0_5, %c0_6] : memref<64x128xf32, #tpu.memory_space<vmem>>, vector<64x128xf32>
    tpu.vector_store %arg5[%c0_5, %c0_6], %5 {strides = array<i32>} : memref<64x128xf32, #tpu.memory_space<vmem>>, vector<64x128xf32>,
    return
  }
  func.func @transform_0(%arg0: i32, %arg1: i32) -> (i32, i32) {
    %c0_i32 = arith.constant 0 : i32
    %c0_i32_0 = arith.constant 0 : i32
    return %arg0, %c0_i32 : i32, i32
  }
  func.func @transform_1(%arg0: i32, %arg1: i32) -> (i32, i32) {
    %c0_i32 = arith.constant 0 : i32
    %c0_i32_0 = arith.constant 0 : i32
    return %c0_i32, %arg1 : i32, i32
  }
  func.func @transform_2(%arg0: i32, %arg1: i32) -> (i32, i32) {
    %c0_i32 = arith.constant 0 : i32
    %c0_i32_0 = arith.constant 0 : i32
    return %c0_i32, %arg1 : i32, i32
  }
  func.func @transform_3(%arg0: i32, %arg1: i32) -> (i32, i32) {
    %c0_i32 = arith.constant 0 : i32
    return %arg0, %arg1 : i32, i32
  }
}

</mosaic_0001>

<llo_original>
// kernel: lstm_fc_pallas.3
$region0: #{lstm_fc_pallas.3}
  #allocation0 [shape = 'u32[]', space=smem, size = 0x4, offset = 0x4, fixed_abs, tag = 'smem constant byte address 0x4 - core index']
  #allocation1 [shape = 'u32[144,128]{1,0:T(1,128)}', space=vmem, size = 0x12000, scoped, tag = 'internal scratch']
  %s0 = inlined_call_operand.vmem [shape: f32[64,128], index: 0, kind: input, shape index: {}]
  %s1 = inlined_call_operand.vmem [shape: f32[128,128], index: 1, kind: input, shape index: {}]
  %s2 = inlined_call_operand.vmem [shape: f32[1,128], index: 2, kind: input, shape index: {}]
  %s3 = inlined_call_operand.vmem [shape: f32[64,128], index: 3, kind: output, shape index: {}]
  %s4 = sld [smem:[#allocation0]]
  $region22: #{lstm_fc_pallas.3} parent=0
    _
  %s6 = ssub.s32 1, %s4
  %s7 = scalar_select 0, %s6, %s4
  // Predicated region
  $region2: #{lstm_fc_pallas.3} parent=0 // pred_check
    _
  $region3: #{lstm_fc_pallas.3} parent=0 // pred_check_branch
    %9 = sbr.rel (0) target = $region5
  $region4: #{lstm_fc_pallas.3} parent=0 // pred_region
    _
  $region5: #{lstm_fc_pallas.3} parent=0 // pred_fallthru
    _
  // Predicated region
  $region6: #{lstm_fc_pallas.3} parent=0 // pred_check
    _
  $region7: #{lstm_fc_pallas.3} parent=0 // pred_check_branch
    %11 = sbr.rel (0) target = $region9
  $region8: #{lstm_fc_pallas.3} parent=0 // pred_region
    _
  $region9: #{lstm_fc_pallas.3} parent=0 // pred_fallthru
    _
  // Predicated region
  $region10: #{lstm_fc_pallas.3} parent=0 // pred_check
    _
  $region11: #{lstm_fc_pallas.3} parent=0 // pred_check_branch
    %13 = sbr.rel (0) target = $region13
  $region12: #{lstm_fc_pallas.3} parent=0 // pred_region
    _
  $region13: #{lstm_fc_pallas.3} parent=0 // pred_fallthru
    _
  %v14 = vld [vmem:[%s0] sm:$0xff]
  %v15 = vld [vmem:[%s0 + $0x8] sm:$0xff]
  %v16 = vld [vmem:[%s0 + $0x10] sm:$0xff]
  %v17 = vld [vmem:[%s0 + $0x18] sm:$0xff]
  %v18 = vld [vmem:[%s0 + $0x20] sm:$0xff]
  %v19 = vld [vmem:[%s0 + $0x28] sm:$0xff]
  %v20 = vld [vmem:[%s0 + $0x30] sm:$0xff]
  %v21 = vld [vmem:[%s0 + $0x38] sm:$0xff]
  %v22 = vld [vmem:[%s1] sm:$0xff]
  %v23 = vld [vmem:[%s1 + $0x8] sm:$0xff]
  %v24 = vld [vmem:[%s1 + $0x10] sm:$0xff]
  %v25 = vld [vmem:[%s1 + $0x18] sm:$0xff]
  %v26 = vld [vmem:[%s1 + $0x20] sm:$0xff]
  %v27 = vld [vmem:[%s1 + $0x28] sm:$0xff]
  %v28 = vld [vmem:[%s1 + $0x30] sm:$0xff]
  %v29 = vld [vmem:[%s1 + $0x38] sm:$0xff]
  %v30 = vld [vmem:[%s1 + $0x40] sm:$0xff]
  %v31 = vld [vmem:[%s1 + $0x48] sm:$0xff]
  %v32 = vld [vmem:[%s1 + $0x50] sm:$0xff]
  %v33 = vld [vmem:[%s1 + $0x58] sm:$0xff]
  %v34 = vld [vmem:[%s1 + $0x60] sm:$0xff]
  %v35 = vld [vmem:[%s1 + $0x68] sm:$0xff]
  %v36 = vld [vmem:[%s1 + $0x70] sm:$0xff]
  %v37 = vld [vmem:[%s1 + $0x78] sm:$0xff]
  %v38 = vld [vmem:[%s2] sm:$0x1]
  %v40 = vlaneseq
  %v41 = vshrl.u32 %v40, 7
  %v42 = vsub.s32 0, %v41
  %v43 = vrot.slane %v38, %v42
  %45 = vmatprep.subr.mxu0 0.0
  %46 = vmatpush1.msra.mxu0 %v37
  %47 = vmatprep.subr.mxu0 0.0
  %48 = vmatpush1.msra.mxu0 %v36
  %49 = vmatprep.subr.mxu0 0.0
  %50 = vmatpush1.msra.mxu0 %v35
  %51 = vmatprep.subr.mxu0 0.0
  %52 = vmatpush1.msra.mxu0 %v34
  %53 = vmatprep.subr.mxu0 0.0
  %54 = vmatpush1.msra.mxu0 %v33
  %55 = vmatprep.subr.mxu0 0.0
  %56 = vmatpush1.msra.mxu0 %v32
  %57 = vmatprep.subr.mxu0 0.0
  %58 = vmatpush1.msra.mxu0 %v31
  %59 = vmatprep.subr.mxu0 0.0
  %60 = vmatpush1.msra.mxu0 %v30
  %61 = vmatprep.subr.mxu0 0.0
  %62 = vmatpush1.msra.mxu0 %v29
  %63 = vmatprep.subr.mxu0 0.0
  %64 = vmatpush1.msra.mxu0 %v28
  %65 = vmatprep.subr.mxu0 0.0
  %66 = vmatpush1.msra.mxu0 %v27
  %67 = vmatprep.subr.mxu0 0.0
  %68 = vmatpush1.msra.mxu0 %v26
  %69 = vmatprep.subr.mxu0 0.0
  %70 = vmatpush1.msra.mxu0 %v25
  %71 = vmatprep.subr.mxu0 0.0
  %72 = vmatpush1.msra.mxu0 %v24
  %73 = vmatprep.subr.mxu0 0.0
  %74 = vmatpush1.msra.mxu0 %v23
  %75 = vmatprep.subr.mxu0 0.0
  %76 = vmatpush1.msra.mxu0 %v22
  %77 = vmatprep.subr.mxu0 0.0
  %78 = vmatpush2.msra.mxu0 0.0
  %79 = vmatprep.subr.mxu0 0.0
  %80 = vmatpush2.msra.mxu0 0.0
  %81 = vmatprep.subr.mxu0 0.0
  %82 = vmatpush2.msra.mxu0 0.0
  %83 = vmatprep.subr.mxu0 0.0
  %84 = vmatpush2.msra.mxu0 0.0
  %85 = vmatprep.subr.mxu0 0.0
  %86 = vmatpush2.msra.mxu0 0.0
  %87 = vmatprep.subr.mxu0 0.0
  %88 = vmatpush2.msra.mxu0 0.0
  %89 = vmatprep.subr.mxu0 0.0
  %90 = vmatpush2.msra.mxu0 0.0
  %91 = vmatprep.subr.mxu0 0.0
  %92 = vmatpush2.msra.mxu0 0.0
  %93 = vmatprep.subr.mxu0 0.0
  %94 = vmatpush2.msra.mxu0 0.0
  %95 = vmatprep.subr.mxu0 0.0
  %96 = vmatpush2.msra.mxu0 0.0
  %97 = vmatprep.subr.mxu0 0.0
  %98 = vmatpush2.msra.mxu0 0.0
  %99 = vmatprep.subr.mxu0 0.0
  %100 = vmatpush2.msra.mxu0 0.0
  %101 = vmatprep.subr.mxu0 0.0
  %102 = vmatpush2.msra.mxu0 0.0
  %103 = vmatprep.subr.mxu0 0.0
  %104 = vmatpush2.msra.mxu0 0.0
  %105 = vmatprep.subr.mxu0 0.0
  %106 = vmatpush2.msra.mxu0 0.0
  %107 = vmatprep.subr.mxu0 0.0
  %108 = vmatpush2.msra.mxu0 0.0
  %109 = vmatprep.mubr.f32.mxu0 0.0
  %110 = vmatmul.mubr.f32.gmra.mxu0 %v14
  %v111 = vpop.f32.mrf.mxu0
  %v112 = vadd.f32 %v43, %v111
  %v113 = vpop.f32.mrf.mxu0
  %114 = vmatprep.mubr.f32.mxu0 0.0
  %115 = vmatmul.mubr.f32.gmra.mxu0 %v15
  %v116 = vpop.f32.mrf.mxu0
  %v117 = vadd.f32 %v43, %v116
  %v118 = vpop.f32.mrf.mxu0
  %119 = vmatprep.mubr.f32.mxu0 0.0
  %120 = vmatmul.mubr.f32.gmra.mxu0 %v16
  %v121 = vpop.f32.mrf.mxu0
  %v122 = vadd.f32 %v43, %v121
  %v123 = vpop.f32.mrf.mxu0
  %124 = vmatprep.mubr.f32.mxu0 0.0
  %125 = vmatmul.mubr.f32.gmra.mxu0 %v17
  %v126 = vpop.f32.mrf.mxu0
  %v127 = vadd.f32 %v43, %v126
  %v128 = vpop.f32.mrf.mxu0
  %129 = vmatprep.mubr.f32.mxu0 0.0
  %130 = vmatmul.mubr.f32.gmra.mxu0 %v18
  %v131 = vpop.f32.mrf.mxu0
  %v132 = vadd.f32 %v43, %v131
  %v133 = vpop.f32.mrf.mxu0
  %134 = vmatprep.mubr.f32.mxu0 0.0
  %135 = vmatmul.mubr.f32.gmra.mxu0 %v19
  %v136 = vpop.f32.mrf.mxu0
  %v137 = vadd.f32 %v43, %v136
  %v138 = vpop.f32.mrf.mxu0
  %139 = vmatprep.mubr.f32.mxu0 0.0
  %140 = vmatmul.mubr.f32.gmra.mxu0 %v20
  %v141 = vpop.f32.mrf.mxu0
  %v142 = vadd.f32 %v43, %v141
  %v143 = vpop.f32.mrf.mxu0
  %144 = vmatprep.mubr.f32.mxu0 0.0
  %145 = vmatmul.mubr.f32.gmra.mxu0 %v21
  %v146 = vpop.f32.mrf.mxu0
  %v147 = vadd.f32 %v43, %v146
  %v148 = vpop.f32.mrf.mxu0
  %149 = vdwg.mxu0
  %150 = vst [vmem:[%s3] sm:$0xff] %v112
  %151 = vst [vmem:[%s3 + $0x8] sm:$0xff] %v117
  %152 = vst [vmem:[%s3 + $0x10] sm:$0xff] %v122
  %153 = vst [vmem:[%s3 + $0x18] sm:$0xff] %v127
  %154 = vst [vmem:[%s3 + $0x20] sm:$0xff] %v132
  %155 = vst [vmem:[%s3 + $0x28] sm:$0xff] %v137
  %156 = vst [vmem:[%s3 + $0x30] sm:$0xff] %v142
  %157 = vst [vmem:[%s3 + $0x38] sm:$0xff] %v147
  // Predicated region
  $region14: #{lstm_fc_pallas.3} parent=0 // pred_check
    _
  $region15: #{lstm_fc_pallas.3} parent=0 // pred_check_branch
    %159 = sbr.rel (0) target = $region17
  $region16: #{lstm_fc_pallas.3} parent=0 // pred_region
    _
  $region17: #{lstm_fc_pallas.3} parent=0 // pred_fallthru
    _
  // Predicated region
  $region18: #{lstm_fc_pallas.3} parent=0 // pred_check
    _
  $region19: #{lstm_fc_pallas.3} parent=0 // pred_check_branch
    %161 = sbr.rel (0) target = $region21
  $region20: #{lstm_fc_pallas.3} parent=0 // pred_region
    _
  $region21: #{lstm_fc_pallas.3} parent=0 // pred_fallthru
    _

// kernel: lstm_fc_pallas.2
$region0: #{lstm_fc_pallas.2}
  #allocation0 [shape = 'u32[]', space=smem, size = 0x4, offset = 0x4, fixed_abs, tag = 'smem constant byte address 0x4 - core index']
  #allocation1 [shape = 'u32[144,128]{1,0:T(1,128)}', space=vmem, size = 0x12000, scoped, tag = 'internal scratch']
  #allocation2 [shape = 'f32[8,128]{1,0:T(8,128)}', space=vmem, size = 0x1000, scoped, tag = 'scratch operand']
  #allocation3 [shape = 'f32[8,128]{1,0:T(8,128)}', space=vmem, size = 0x1000, scoped, tag = 'scratch operand']
  %s0 = inlined_call_operand.vmem [shape: f32[8,8,128], index: 0, kind: input, shape index: {}]
  %s1 = inlined_call_operand.vmem [shape: f32[256,512], index: 1, kind: input, shape index: {}]
  %s2 = inlined_call_operand.vmem [shape: f32[1,512], index: 2, kind: input, shape index: {}]
  %s3 = inlined_call_operand.vmem [shape: f32[8,8,128], index: 3, kind: output, shape index: {}]
  %s4 = sld [smem:[#allocation0]]
  $region26: #{lstm_fc_pallas.2} parent=0
    _
  %s6 = ssub.s32 1, %s4
  %s7 = scalar_select 0, %s6, %s4
  // Predicated region
  $region2: #{lstm_fc_pallas.2} parent=0 // pred_check
    _
  $region3: #{lstm_fc_pallas.2} parent=0 // pred_check_branch
    %9 = sbr.rel (0) target = $region5
  $region4: #{lstm_fc_pallas.2} parent=0 // pred_region
    _
  $region5: #{lstm_fc_pallas.2} parent=0 // pred_fallthru
    _
  // Predicated region
  $region6: #{lstm_fc_pallas.2} parent=0 // pred_check
    _
  $region7: #{lstm_fc_pallas.2} parent=0 // pred_check_branch
    %11 = sbr.rel (0) target = $region9
  $region8: #{lstm_fc_pallas.2} parent=0 // pred_region
    _
  $region9: #{lstm_fc_pallas.2} parent=0 // pred_fallthru
    _
  // Predicated region
  $region10: #{lstm_fc_pallas.2} parent=0 // pred_check
    _
  $region11: #{lstm_fc_pallas.2} parent=0 // pred_check_branch
    %13 = sbr.rel (0) target = $region13
  $region12: #{lstm_fc_pallas.2} parent=0 // pred_region
    _
  $region13: #{lstm_fc_pallas.2} parent=0 // pred_fallthru
    _
  %p14 = scmp.eq.s32.totalorder 0, 0
  // Predicated region
  $region14: #{lstm_fc_pallas.2} parent=0 // pred_check
    %p15 = pneg %p14
  $region15: #{lstm_fc_pallas.2} parent=0 // pred_check_branch
    %17 = sbr.rel (%p15) target = $region17
  $region16: #{lstm_fc_pallas.2} parent=0 // pred_region
    %18 = vst [vmem:[#allocation2] sm:$0xff] 0.0
    %19 = vst [vmem:[#allocation3] sm:$0xff] 0.0
  $region17: #{lstm_fc_pallas.2} parent=0 // pred_fallthru
    _
  %v20 = vld [vmem:[%s1] sm:$0xff]
  %v21 = vld [vmem:[%s1 + $0x8] sm:$0xff]
  %v22 = vld [vmem:[%s1 + $0x10] sm:$0xff]
  %v23 = vld [vmem:[%s1 + $0x18] sm:$0xff]
  %v24 = vld [vmem:[%s1 + $0x20] sm:$0xff]
  %v25 = vld [vmem:[%s1 + $0x28] sm:$0xff]
  %v26 = vld [vmem:[%s1 + $0x30] sm:$0xff]
  %v27 = vld [vmem:[%s1 + $0x38] sm:$0xff]
  %v28 = vld [vmem:[%s1 + $0x40] sm:$0xff]
  %v29 = vld [vmem:[%s1 + $0x48] sm:$0xff]
  %v30 = vld [vmem:[%s1 + $0x50] sm:$0xff]
  %v31 = vld [vmem:[%s1 + $0x58] sm:$0xff]
  %v32 = vld [vmem:[%s1 + $0x60] sm:$0xff]
  %v33 = vld [vmem:[%s1 + $0x68] sm:$0xff]
  %v34 = vld [vmem:[%s1 + $0x70] sm:$0xff]
  %v35 = vld [vmem:[%s1 + $0x78] sm:$0xff]
  %v36 = vld [vmem:[%s1 + $0x80] sm:$0xff]
  %v37 = vld [vmem:[%s1 + $0x88] sm:$0xff]
  %v38 = vld [vmem:[%s1 + $0x90] sm:$0xff]
  %v39 = vld [vmem:[%s1 + $0x98] sm:$0xff]
  %v40 = vld [vmem:[%s1 + $0xa0] sm:$0xff]
  %v41 = vld [vmem:[%s1 + $0xa8] sm:$0xff]
  %v42 = vld [vmem:[%s1 + $0xb0] sm:$0xff]
  %v43 = vld [vmem:[%s1 + $0xb8] sm:$0xff]
  %v44 = vld [vmem:[%s1 + $0xc0] sm:$0xff]
  %v45 = vld [vmem:[%s1 + $0xc8] sm:$0xff]
  %v46 = vld [vmem:[%s1 + $0xd0] sm:$0xff]
  %v47 = vld [vmem:[%s1 + $0xd8] sm:$0xff]
  %v48 = vld [vmem:[%s1 + $0xe0] sm:$0xff]
  %v49 = vld [vmem:[%s1 + $0xe8] sm:$0xff]
  %v50 = vld [vmem:[%s1 + $0xf0] sm:$0xff]
  %v51 = vld [vmem:[%s1 + $0xf8] sm:$0xff]
  %v52 = vld [vmem:[%s1 + $0x100] sm:$0xff]
  %v53 = vld [vmem:[%s1 + $0x108] sm:$0xff]
  %v54 = vld [vmem:[%s1 + $0x110] sm:$0xff]
  %v55 = vld [vmem:[%s1 + $0x118] sm:$0xff]
  %v56 = vld [vmem:[%s1 + $0x120] sm:$0xff]
  %v57 = vld [vmem:[%s1 + $0x128] sm:$0xff]
  %v58 = vld [vmem:[%s1 + $0x130] sm:$0xff]
  %v59 = vld [vmem:[%s1 + $0x138] sm:$0xff]
  %v60 = vld [vmem:[%s1 + $0x140] sm:$0xff]
  %v61 = vld [vmem:[%s1 + $0x148] sm:$0xff]
  %v62 = vld [vmem:[%s1 + $0x150] sm:$0xff]
  %v63 = vld [vmem:[%s1 + $0x158] sm:$0xff]
  %v64 = vld [vmem:[%s1 + $0x160] sm:$0xff]
  %v65 = vld [vmem:[%s1 + $0x168] sm:$0xff]
  %v66 = vld [vmem:[%s1 + $0x170] sm:$0xff]
  %v67 = vld [vmem:[%s1 + $0x178] sm:$0xff]
  %v68 = vld [vmem:[%s1 + $0x180] sm:$0xff]
  %v69 = vld [vmem:[%s1 + $0x188] sm:$0xff]
  %v70 = vld [vmem:[%s1 + $0x190] sm:$0xff]
  %v71 = vld [vmem:[%s1 + $0x198] sm:$0xff]
  %v72 = vld [vmem:[%s1 + $0x1a0] sm:$0xff]
  %v73 = vld [vmem:[%s1 + $0x1a8] sm:$0xff]
  %v74 = vld [vmem:[%s1 + $0x1b0] sm:$0xff]
  %v75 = vld [vmem:[%s1 + $0x1b8] sm:$0xff]
  %v76 = vld [vmem:[%s1 + $0x1c0] sm:$0xff]
  %v77 = vld [vmem:[%s1 + $0x1c8] sm:$0xff]
  %v78 = vld [vmem:[%s1 + $0x1d0] sm:$0xff]
  %v79 = vld [vmem:[%s1 + $0x1d8] sm:$0xff]
  %v80 = vld [vmem:[%s1 + $0x1e0] sm:$0xff]
  %v81 = vld [vmem:[%s1 + $0x1e8] sm:$0xff]
  %v82 = vld [vmem:[%s1 + $0x1f0] sm:$0xff]
  %v83 = vld [vmem:[%s1 + $0x1f8] sm:$0xff]
  %v84 = vld [vmem:[%s1 + $0x200] sm:$0xff]
  %v85 = vld [vmem:[%s1 + $0x208] sm:$0xff]
  %v86 = vld [vmem:[%s1 + $0x210] sm:$0xff]
  %v87 = vld [vmem:[%s1 + $0x218] sm:$0xff]
  %v88 = vld [vmem:[%s1 + $0x220] sm:$0xff]
  %v89 = vld [vmem:[%s1 + $0x228] sm:$0xff]
  %v90 = vld [vmem:[%s1 + $0x230] sm:$0xff]
  %v91 = vld [vmem:[%s1 + $0x238] sm:$0xff]
  %v92 = vld [vmem:[%s1 + $0x240] sm:$0xff]
  %v93 = vld [vmem:[%s1 + $0x248] sm:$0xff]
  %v94 = vld [vmem:[%s1 + $0x250] sm:$0xff]
  %v95 = vld [vmem:[%s1 + $0x258] sm:$0xff]
  %v96 = vld [vmem:[%s1 + $0x260] sm:$0xff]
  %v97 = vld [vmem:[%s1 + $0x268] sm:$0xff]
  %v98 = vld [vmem:[%s1 + $0x270] sm:$0xff]
  %v99 = vld [vmem:[%s1 + $0x278] sm:$0xff]
  %v100 = vld [vmem:[%s1 + $0x280] sm:$0xff]
  %v101 = vld [vmem:[%s1 + $0x288] sm:$0xff]
  %v102 = vld [vmem:[%s1 + $0x290] sm:$0xff]
  %v103 = vld [vmem:[%s1 + $0x298] sm:$0xff]
  %v104 = vld [vmem:[%s1 + $0x2a0] sm:$0xff]
  %v105 = vld [vmem:[%s1 + $0x2a8] sm:$0xff]
  %v106 = vld [vmem:[%s1 + $0x2b0] sm:$0xff]
  %v107 = vld [vmem:[%s1 + $0x2b8] sm:$0xff]
  %v108 = vld [vmem:[%s1 + $0x2c0] sm:$0xff]
  %v109 = vld [vmem:[%s1 + $0x2c8] sm:$0xff]
  %v110 = vld [vmem:[%s1 + $0x2d0] sm:$0xff]
  %v111 = vld [vmem:[%s1 + $0x2d8] sm:$0xff]
  %v112 = vld [vmem:[%s1 + $0x2e0] sm:$0xff]
  %v113 = vld [vmem:[%s1 + $0x2e8] sm:$0xff]
  %v114 = vld [vmem:[%s1 + $0x2f0] sm:$0xff]
  %v115 = vld [vmem:[%s1 + $0x2f8] sm:$0xff]
  %v116 = vld [vmem:[%s1 + $0x300] sm:$0xff]
  %v117 = vld [vmem:[%s1 + $0x308] sm:$0xff]
  %v118 = vld [vmem:[%s1 + $0x310] sm:$0xff]
  %v119 = vld [vmem:[%s1 + $0x318] sm:$0xff]
  %v120 = vld [vmem:[%s1 + $0x320] sm:$0xff]
  %v121 = vld [vmem:[%s1 + $0x328] sm:$0xff]
  %v122 = vld [vmem:[%s1 + $0x330] sm:$0xff]
  %v123 = vld [vmem:[%s1 + $0x338] sm:$0xff]
  %v124 = vld [vmem:[%s1 + $0x340] sm:$0xff]
  %v125 = vld [vmem:[%s1 + $0x348] sm:$0xff]
  %v126 = vld [vmem:[%s1 + $0x350] sm:$0xff]
  %v127 = vld [vmem:[%s1 + $0x358] sm:$0xff]
  %v128 = vld [vmem:[%s1 + $0x360] sm:$0xff]
  %v129 = vld [vmem:[%s1 + $0x368] sm:$0xff]
  %v130 = vld [vmem:[%s1 + $0x370] sm:$0xff]
  %v131 = vld [vmem:[%s1 + $0x378] sm:$0xff]
  %v132 = vld [vmem:[%s1 + $0x380] sm:$0xff]
  %v133 = vld [vmem:[%s1 + $0x388] sm:$0xff]
  %v134 = vld [vmem:[%s1 + $0x390] sm:$0xff]
  %v135 = vld [vmem:[%s1 + $0x398] sm:$0xff]
  %v136 = vld [vmem:[%s1 + $0x3a0] sm:$0xff]
  %v137 = vld [vmem:[%s1 + $0x3a8] sm:$0xff]
  %v138 = vld [vmem:[%s1 + $0x3b0] sm:$0xff]
  %v139 = vld [vmem:[%s1 + $0x3b8] sm:$0xff]
  %v140 = vld [vmem:[%s1 + $0x3c0] sm:$0xff]
  %v141 = vld [vmem:[%s1 + $0x3c8] sm:$0xff]
  %v142 = vld [vmem:[%s1 + $0x3d0] sm:$0xff]
  %v143 = vld [vmem:[%s1 + $0x3d8] sm:$0xff]
  %v144 = vld [vmem:[%s1 + $0x3e0] sm:$0xff]
  %v145 = vld [vmem:[%s1 + $0x3e8] sm:$0xff]
  %v146 = vld [vmem:[%s1 + $0x3f0] sm:$0xff]
  %v147 = vld [vmem:[%s1 + $0x3f8] sm:$0xff]
  %v148 = vld [vmem:[%s2] sm:$0xf]
  %v149 = vld [vmem:[%s0] sm:$0xff]
  %v150 = vld [vmem:[#allocation2] sm:$0xff]
  %v152 = vlaneseq
  %v153 = vshrl.u32 %v152, 7
  %v154 = vsub.s32 0, %v153
  %v155 = vrot.slane %v148, %v154
  %v156 = vlaneseq
  %v157 = vshrl.u32 %v156, 7
  %v158 = vsub.s32 1, %v157
  %v159 = vrot.slane %v148, %v158
  %v160 = vlaneseq
  %v161 = vshrl.u32 %v160, 7
  %v162 = vsub.s32 2, %v161
  %v163 = vrot.slane %v148, %v162
  %v164 = vlaneseq
  %v165 = vshrl.u32 %v164, 7
  %v166 = vsub.s32 3, %v165
  %v167 = vrot.slane %v148, %v166
  %172 = vmatprep.subr.mxu0 %v81
  %173 = vmatpush1.msra.mxu0 %v80
  %174 = vmatprep.subr.mxu0 %v77
  %175 = vmatpush1.msra.mxu0 %v76
  %176 = vmatprep.subr.mxu0 %v73
  %177 = vmatpush1.msra.mxu0 %v72
  %178 = vmatprep.subr.mxu0 %v69
  %179 = vmatpush1.msra.mxu0 %v68
  %180 = vmatprep.subr.mxu0 %v65
  %181 = vmatpush1.msra.mxu0 %v64
  %182 = vmatprep.subr.mxu0 %v61
  %183 = vmatpush1.msra.mxu0 %v60
  %184 = vmatprep.subr.mxu0 %v57
  %185 = vmatpush1.msra.mxu0 %v56
  %186 = vmatprep.subr.mxu0 %v53
  %187 = vmatpush1.msra.mxu0 %v52
  %188 = vmatprep.subr.mxu0 %v49
  %189 = vmatpush1.msra.mxu0 %v48
  %190 = vmatprep.subr.mxu0 %v45
  %191 = vmatpush1.msra.mxu0 %v44
  %192 = vmatprep.subr.mxu0 %v41
  %193 = vmatpush1.msra.mxu0 %v40
  %194 = vmatprep.subr.mxu0 %v37
  %195 = vmatpush1.msra.mxu0 %v36
  %196 = vmatprep.subr.mxu0 %v33
  %197 = vmatpush1.msra.mxu0 %v32
  %198 = vmatprep.subr.mxu0 %v29
  %199 = vmatpush1.msra.mxu0 %v28
  %200 = vmatprep.subr.mxu0 %v25
  %201 = vmatpush1.msra.mxu0 %v24
  %202 = vmatprep.subr.mxu0 %v21
  %203 = vmatpush1.msra.mxu0 %v20
  %204 = vmatprep.subr.mxu0 %v145
  %205 = vmatpush2.msra.mxu0 %v144
  %206 = vmatprep.subr.mxu0 %v141
  %207 = vmatpush2.msra.mxu0 %v140
  %208 = vmatprep.subr.mxu0 %v137
  %209 = vmatpush2.msra.mxu0 %v136
  %210 = vmatprep.subr.mxu0 %v133
  %211 = vmatpush2.msra.mxu0 %v132
  %212 = vmatprep.subr.mxu0 %v129
  %213 = vmatpush2.msra.mxu0 %v128
  %214 = vmatprep.subr.mxu0 %v125
  %215 = vmatpush2.msra.mxu0 %v124
  %216 = vmatprep.subr.mxu0 %v121
  %217 = vmatpush2.msra.mxu0 %v120
  %218 = vmatprep.subr.mxu0 %v117
  %219 = vmatpush2.msra.mxu0 %v116
  %220 = vmatprep.subr.mxu0 %v113
  %221 = vmatpush2.msra.mxu0 %v112
  %222 = vmatprep.subr.mxu0 %v109
  %223 = vmatpush2.msra.mxu0 %v108
  %224 = vmatprep.subr.mxu0 %v105
  %225 = vmatpush2.msra.mxu0 %v104
  %226 = vmatprep.subr.mxu0 %v101
  %227 = vmatpush2.msra.mxu0 %v100
  %228 = vmatprep.subr.mxu0 %v97
  %229 = vmatpush2.msra.mxu0 %v96
  %230 = vmatprep.subr.mxu0 %v93
  %231 = vmatpush2.msra.mxu0 %v92
  %232 = vmatprep.subr.mxu0 %v89
  %233 = vmatpush2.msra.mxu0 %v88
  %234 = vmatprep.subr.mxu0 %v85
  %235 = vmatpush2.msra.mxu0 %v84
  %236 = vmatprep.mubr.f32.mxu0 %v150
  %237 = vmatmul.mubr.f32.gmra.mxu0 %v149
  %v238 = vpop.f32.mrf.mxu0
  %v239 = vadd.f32 %v155, %v238
  %v240 = vpop.f32.mrf.mxu0
  %v241 = vadd.f32 %v159, %v240
  %242 = vdwg.mxu0
  %243 = vmatprep.subr.mxu0 %v83
  %244 = vmatpush1.msra.mxu0 %v82
  %245 = vmatprep.subr.mxu0 %v79
  %246 = vmatpush1.msra.mxu0 %v78
  %247 = vmatprep.subr.mxu0 %v75
  %248 = vmatpush1.msra.mxu0 %v74
  %249 = vmatprep.subr.mxu0 %v71
  %250 = vmatpush1.msra.mxu0 %v70
  %251 = vmatprep.subr.mxu0 %v67
  %252 = vmatpush1.msra.mxu0 %v66
  %253 = vmatprep.subr.mxu0 %v63
  %254 = vmatpush1.msra.mxu0 %v62
  %255 = vmatprep.subr.mxu0 %v59
  %256 = vmatpush1.msra.mxu0 %v58
  %257 = vmatprep.subr.mxu0 %v55
  %258 = vmatpush1.msra.mxu0 %v54
  %259 = vmatprep.subr.mxu0 %v51
  %260 = vmatpush1.msra.mxu0 %v50
  %261 = vmatprep.subr.mxu0 %v47
  %262 = vmatpush1.msra.mxu0 %v46
  %263 = vmatprep.subr.mxu0 %v43
  %264 = vmatpush1.msra.mxu0 %v42
  %265 = vmatprep.subr.mxu0 %v39
  %266 = vmatpush1.msra.mxu0 %v38
  %267 = vmatprep.subr.mxu0 %v35
  %268 = vmatpush1.msra.mxu0 %v34
  %269 = vmatprep.subr.mxu0 %v31
  %270 = vmatpush1.msra.mxu0 %v30
  %271 = vmatprep.subr.mxu0 %v27
  %272 = vmatpush1.msra.mxu0 %v26
  %273 = vmatprep.subr.mxu0 %v23
  %274 = vmatpush1.msra.mxu0 %v22
  %275 = vmatprep.subr.mxu0 %v147
  %276 = vmatpush2.msra.mxu0 %v146
  %277 = vmatprep.subr.mxu0 %v143
  %278 = vmatpush2.msra.mxu0 %v142
  %279 = vmatprep.subr.mxu0 %v139
  %280 = vmatpush2.msra.mxu0 %v138
  %281 = vmatprep.subr.mxu0 %v135
  %282 = vmatpush2.msra.mxu0 %v134
  %283 = vmatprep.subr.mxu0 %v131
  %284 = vmatpush2.msra.mxu0 %v130
  %285 = vmatprep.subr.mxu0 %v127
  %286 = vmatpush2.msra.mxu0 %v126
  %287 = vmatprep.subr.mxu0 %v123
  %288 = vmatpush2.msra.mxu0 %v122
  %289 = vmatprep.subr.mxu0 %v119
  %290 = vmatpush2.msra.mxu0 %v118
  %291 = vmatprep.subr.mxu0 %v115
  %292 = vmatpush2.msra.mxu0 %v114
  %293 = vmatprep.subr.mxu0 %v111
  %294 = vmatpush2.msra.mxu0 %v110
  %295 = vmatprep.subr.mxu0 %v107
  %296 = vmatpush2.msra.mxu0 %v106
  %297 = vmatprep.subr.mxu0 %v103
  %298 = vmatpush2.msra.mxu0 %v102
  %299 = vmatprep.subr.mxu0 %v99
  %300 = vmatpush2.msra.mxu0 %v98
  %301 = vmatprep.subr.mxu0 %v95
  %302 = vmatpush2.msra.mxu0 %v94
  %303 = vmatprep.subr.mxu0 %v91
  %304 = vmatpush2.msra.mxu0 %v90
  %305 = vmatprep.subr.mxu0 %v87
  %306 = vmatpush2.msra.mxu0 %v86
  %307 = vmatprep.mubr.f32.mxu0 %v150
  %308 = vmatmul.mubr.f32.gmra.mxu0 %v149
  %v309 = vpop.f32.mrf.mxu0
  %v310 = vadd.f32 %v163, %v309
  %v311 = vpop.f32.mrf.mxu0
  %v312 = vadd.f32 %v167, %v311
  %313 = vdwg.mxu0
  %v314 = vxor.u32 %v239, 2147483648
  %v315 = vmul.f32 %v314, 1.442695
  %v316 = vpow.pop %v315
  %v317 = vadd.f32 %v316, 1.0
  %v318 = vrcp.pop %v317
  %v319 = vmul.f32 1.0, %v318
  %v320 = vxor.u32 %v241, 2147483648
  %v321 = vmul.f32 %v320, 1.442695
  %v322 = vpow.pop %v321
  %v323 = vadd.f32 %v322, 1.0
  %v324 = vrcp.pop %v323
  %v325 = vmul.f32 1.0, %v324
  %v326 = vtanh.pop %v310
  %v327 = vxor.u32 %v312, 2147483648
  %v328 = vmul.f32 %v327, 1.442695
  %v329 = vpow.pop %v328
  %v330 = vadd.f32 %v329, 1.0
  %v331 = vrcp.pop %v330
  %v332 = vmul.f32 1.0, %v331
  %v333 = vld [vmem:[#allocation3] sm:$0xff]
  %v334 = vmul.f32 %v325, %v333
  %v335 = vmul.f32 %v319, %v326
  %v336 = vadd.f32 %v334, %v335
  %v337 = vtanh.pop %v336
  %v338 = vmul.f32 %v332, %v337
  %339 = vst [vmem:[#allocation3] sm:$0xff] %v336
  %340 = vst [vmem:[#allocation2] sm:$0xff] %v338
  %341 = vst [vmem:[%s3] sm:$0xff] %v338
  %s342 = scalar_lea.vmem %s0, 8
  %v343 = vld [vmem:[%s342] sm:$0xff]
  %v344 = vld [vmem:[#allocation2] sm:$0xff]
  %345 = vmatprep.subr.mxu0 %v81
  %346 = vmatpush1.msra.mxu0 %v80
  %347 = vmatprep.subr.mxu0 %v77
  %348 = vmatpush1.msra.mxu0 %v76
  %349 = vmatprep.subr.mxu0 %v73
  %350 = vmatpush1.msra.mxu0 %v72
  %351 = vmatprep.subr.mxu0 %v69
  %352 = vmatpush1.msra.mxu0 %v68
  %353 = vmatprep.subr.mxu0 %v65
  %354 = vmatpush1.msra.mxu0 %v64
  %355 = vmatprep.subr.mxu0 %v61
  %356 = vmatpush1.msra.mxu0 %v60
  %357 = vmatprep.subr.mxu0 %v57
  %358 = vmatpush1.msra.mxu0 %v56
  %359 = vmatprep.subr.mxu0 %v53
  %360 = vmatpush1.msra.mxu0 %v52
  %361 = vmatprep.subr.mxu0 %v49
  %362 = vmatpush1.msra.mxu0 %v48
  %363 = vmatprep.subr.mxu0 %v45
  %364 = vmatpush1.msra.mxu0 %v44
  %365 = vmatprep.subr.mxu0 %v41
  %366 = vmatpush1.msra.mxu0 %v40
  %367 = vmatprep.subr.mxu0 %v37
  %368 = vmatpush1.msra.mxu0 %v36
  %369 = vmatprep.subr.mxu0 %v33
  %370 = vmatpush1.msra.mxu0 %v32
  %371 = vmatprep.subr.mxu0 %v29
  %372 = vmatpush1.msra.mxu0 %v28
  %373 = vmatprep.subr.mxu0 %v25
  %374 = vmatpush1.msra.mxu0 %v24
  %375 = vmatprep.subr.mxu0 %v21
  %376 = vmatpush1.msra.mxu0 %v20
  %377 = vmatprep.subr.mxu0 %v145
  %378 = vmatpush2.msra.mxu0 %v144
  %379 = vmatprep.subr.mxu0 %v141
  %380 = vmatpush2.msra.mxu0 %v140
  %381 = vmatprep.subr.mxu0 %v137
  %382 = vmatpush2.msra.mxu0 %v136
  %383 = vmatprep.subr.mxu0 %v133
  %384 = vmatpush2.msra.mxu0 %v132
  %385 = vmatprep.subr.mxu0 %v129
  %386 = vmatpush2.msra.mxu0 %v128
  %387 = vmatprep.subr.mxu0 %v125
  %388 = vmatpush2.msra.mxu0 %v124
  %389 = vmatprep.subr.mxu0 %v121
  %390 = vmatpush2.msra.mxu0 %v120
  %391 = vmatprep.subr.mxu0 %v117
  %392 = vmatpush2.msra.mxu0 %v116
  %393 = vmatprep.subr.mxu0 %v113
  %394 = vmatpush2.msra.mxu0 %v112
  %395 = vmatprep.subr.mxu0 %v109
  %396 = vmatpush2.msra.mxu0 %v108
  %397 = vmatprep.subr.mxu0 %v105
  %398 = vmatpush2.msra.mxu0 %v104
  %399 = vmatprep.subr.mxu0 %v101
  %400 = vmatpush2.msra.mxu0 %v100
  %401 = vmatprep.subr.mxu0 %v97
  %402 = vmatpush2.msra.mxu0 %v96
  %403 = vmatprep.subr.mxu0 %v93
  %404 = vmatpush2.msra.mxu0 %v92
  %405 = vmatprep.subr.mxu0 %v89
  %406 = vmatpush2.msra.mxu0 %v88
  %407 = vmatprep.subr.mxu0 %v85
  %408 = vmatpush2.msra.mxu0 %v84
  %409 = vmatprep.mubr.f32.mxu0 %v344
  %410 = vmatmul.mubr.f32.gmra.mxu0 %v343
  %v411 = vpop.f32.mrf.mxu0
  %v412 = vadd.f32 %v155, %v411
  %v413 = vpop.f32.mrf.mxu0
  %v414 = vadd.f32 %v159, %v413
  %415 = vdwg.mxu0
  %416 = vmatprep.subr.mxu0 %v83
  %417 = vmatpush1.msra.mxu0 %v82
  %418 = vmatprep.subr.mxu0 %v79
  %419 = vmatpush1.msra.mxu0 %v78
  %420 = vmatprep.subr.mxu0 %v75
  %421 = vmatpush1.msra.mxu0 %v74
  %422 = vmatprep.subr.mxu0 %v71
  %423 = vmatpush1.msra.mxu0 %v70
  %424 = vmatprep.subr.mxu0 %v67
  %425 = vmatpush1.msra.mxu0 %v66
  %426 = vmatprep.subr.mxu0 %v63
  %427 = vmatpush1.msra.mxu0 %v62
  %428 = vmatprep.subr.mxu0 %v59
  %429 = vmatpush1.msra.mxu0 %v58
  %430 = vmatprep.subr.mxu0 %v55
  %431 = vmatpush1.msra.mxu0 %v54
  %432 = vmatprep.subr.mxu0 %v51
  %433 = vmatpush1.msra.mxu0 %v50
  %434 = vmatprep.subr.mxu0 %v47
  %435 = vmatpush1.msra.mxu0 %v46
  %436 = vmatprep.subr.mxu0 %v43
  %437 = vmatpush1.msra.mxu0 %v42
  %438 = vmatprep.subr.mxu0 %v39
  %439 = vmatpush1.msra.mxu0 %v38
  %440 = vmatprep.subr.mxu0 %v35
  %441 = vmatpush1.msra.mxu0 %v34
  %442 = vmatprep.subr.mxu0 %v31
  %443 = vmatpush1.msra.mxu0 %v30
  %444 = vmatprep.subr.mxu0 %v27
  %445 = vmatpush1.msra.mxu0 %v26
  %446 = vmatprep.subr.mxu0 %v23
  %447 = vmatpush1.msra.mxu0 %v22
  %448 = vmatprep.subr.mxu0 %v147
  %449 = vmatpush2.msra.mxu0 %v146
  %450 = vmatprep.subr.mxu0 %v143
  %451 = vmatpush2.msra.mxu0 %v142
  %452 = vmatprep.subr.mxu0 %v139
  %453 = vmatpush2.msra.mxu0 %v138
  %454 = vmatprep.subr.mxu0 %v135
  %455 = vmatpush2.msra.mxu0 %v134
  %456 = vmatprep.subr.mxu0 %v131
  %457 = vmatpush2.msra.mxu0 %v130
  %458 = vmatprep.subr.mxu0 %v127
  %459 = vmatpush2.msra.mxu0 %v126
  %460 = vmatprep.subr.mxu0 %v123
  %461 = vmatpush2.msra.mxu0 %v122
  %462 = vmatprep.subr.mxu0 %v119
  %463 = vmatpush2.msra.mxu0 %v118
  %464 = vmatprep.subr.mxu0 %v115
  %465 = vmatpush2.msra.mxu0 %v114
  %466 = vmatprep.subr.mxu0 %v111
  %467 = vmatpush2.msra.mxu0 %v110
  %468 = vmatprep.subr.mxu0 %v107
  %469 = vmatpush2.msra.mxu0 %v106
  %470 = vmatprep.subr.mxu0 %v103
  %471 = vmatpush2.msra.mxu0 %v102
  %472 = vmatprep.subr.mxu0 %v99
  %473 = vmatpush2.msra.mxu0 %v98
  %474 = vmatprep.subr.mxu0 %v95
  %475 = vmatpush2.msra.mxu0 %v94
  %476 = vmatprep.subr.mxu0 %v91
  %477 = vmatpush2.msra.mxu0 %v90
  %478 = vmatprep.subr.mxu0 %v87
  %479 = vmatpush2.msra.mxu0 %v86
  %480 = vmatprep.mubr.f32.mxu0 %v344
  %481 = vmatmul.mubr.f32.gmra.mxu0 %v343
  %v482 = vpop.f32.mrf.mxu0
  %v483 = vadd.f32 %v163, %v482
  %v484 = vpop.f32.mrf.mxu0
  %v485 = vadd.f32 %v167, %v484
  %486 = vdwg.mxu0
  %v487 = vxor.u32 %v412, 2147483648
  %v488 = vmul.f32 %v487, 1.442695
  %v489 = vpow.pop %v488
  %v490 = vadd.f32 %v489, 1.0
  %v491 = vrcp.pop %v490
  %v492 = vmul.f32 1.0, %v491
  %v493 = vxor.u32 %v414, 2147483648
  %v494 = vmul.f32 %v493, 1.442695
  %v495 = vpow.pop %v494
  %v496 = vadd.f32 %v495, 1.0
  %v497 = vrcp.pop %v496
  %v498 = vmul.f32 1.0, %v497
  %v499 = vtanh.pop %v483
  %v500 = vxor.u32 %v485, 2147483648
  %v501 = vmul.f32 %v500, 1.442695
  %v502 = vpow.pop %v501
  %v503 = vadd.f32 %v502, 1.0
  %v504 = vrcp.pop %v503
  %v505 = vmul.f32 1.0, %v504
  %v506 = vld [vmem:[#allocation3] sm:$0xff]
  %v507 = vmul.f32 %v498, %v506
  %v508 = vmul.f32 %v492, %v499
  %v509 = vadd.f32 %v507, %v508
  %v510 = vtanh.pop %v509
  %v511 = vmul.f32 %v505, %v510
  %512 = vst [vmem:[#allocation3] sm:$0xff] %v509
  %513 = vst [vmem:[#allocation2] sm:$0xff] %v511
  %s514 = scalar_lea.vmem %s3, 8
  %515 = vst [vmem:[%s514] sm:$0xff] %v511
  %s516 = scalar_lea.vmem %s0, 16
  %v517 = vld [vmem:[%s516] sm:$0xff]
  %v518 = vld [vmem:[#allocation2] sm:$0xff]
  %519 = vmatprep.subr.mxu0 %v81
  %520 = vmatpush1.msra.mxu0 %v80
  %521 = vmatprep.subr.mxu0 %v77
  %522 = vmatpush1.msra.mxu0 %v76
  %523 = vmatprep.subr.mxu0 %v73
  %524 = vmatpush1.msra.mxu0 %v72
  %525 = vmatprep.subr.mxu0 %v69
  %526 = vmatpush1.msra.mxu0 %v68
  %527 = vmatprep.subr.mxu0 %v65
  %528 = vmatpush1.msra.mxu0 %v64
  %529 = vmatprep.subr.mxu0 %v61
  %530 = vmatpush1.msra.mxu0 %v60
  %531 = vmatprep.subr.mxu0 %v57
  %532 = vmatpush1.msra.mxu0 %v56
  %533 = vmatprep.subr.mxu0 %v53
  %534 = vmatpush1.msra.mxu0 %v52
  %535 = vmatprep.subr.mxu0 %v49
  %536 = vmatpush1.msra.mxu0 %v48
  %537 = vmatprep.subr.mxu0 %v45
  %538 = vmatpush1.msra.mxu0 %v44
  %539 = vmatprep.subr.mxu0 %v41
  %540 = vmatpush1.msra.mxu0 %v40
  %541 = vmatprep.subr.mxu0 %v37
  %542 = vmatpush1.msra.mxu0 %v36
  %543 = vmatprep.subr.mxu0 %v33
  %544 = vmatpush1.msra.mxu0 %v32
  %545 = vmatprep.subr.mxu0 %v29
  %546 = vmatpush1.msra.mxu0 %v28
  %547 = vmatprep.subr.mxu0 %v25
  %548 = vmatpush1.msra.mxu0 %v24
  %549 = vmatprep.subr.mxu0 %v21
  %550 = vmatpush1.msra.mxu0 %v20
  %551 = vmatprep.subr.mxu0 %v145
  %552 = vmatpush2.msra.mxu0 %v144
  %553 = vmatprep.subr.mxu0 %v141
  %554 = vmatpush2.msra.mxu0 %v140
  %555 = vmatprep.subr.mxu0 %v137
  %556 = vmatpush2.msra.mxu0 %v136
  %557 = vmatprep.subr.mxu0 %v133
  %558 = vmatpush2.msra.mxu0 %v132
  %559 = vmatprep.subr.mxu0 %v129
  %560 = vmatpush2.msra.mxu0 %v128
  %561 = vmatprep.subr.mxu0 %v125
  %562 = vmatpush2.msra.mxu0 %v124
  %563 = vmatprep.subr.mxu0 %v121
  %564 = vmatpush2.msra.mxu0 %v120
  %565 = vmatprep.subr.mxu0 %v117
  %566 = vmatpush2.msra.mxu0 %v116
  %567 = vmatprep.subr.mxu0 %v113
  %568 = vmatpush2.msra.mxu0 %v112
  %569 = vmatprep.subr.mxu0 %v109
  %570 = vmatpush2.msra.mxu0 %v108
  %571 = vmatprep.subr.mxu0 %v105
  %572 = vmatpush2.msra.mxu0 %v104
  %573 = vmatprep.subr.mxu0 %v101
  %574 = vmatpush2.msra.mxu0 %v100
  %575 = vmatprep.subr.mxu0 %v97
  %576 = vmatpush2.msra.mxu0 %v96
  %577 = vmatprep.subr.mxu0 %v93
  %578 = vmatpush2.msra.mxu0 %v92
  %579 = vmatprep.subr.mxu0 %v89
  %580 = vmatpush2.msra.mxu0 %v88
  %581 = vmatprep.subr.mxu0 %v85
  %582 = vmatpush2.msra.mxu0 %v84
  %583 = vmatprep.mubr.f32.mxu0 %v518
  %584 = vmatmul.mubr.f32.gmra.mxu0 %v517
  %v585 = vpop.f32.mrf.mxu0
  %v586 = vadd.f32 %v155, %v585
  %v587 = vpop.f32.mrf.mxu0
  %v588 = vadd.f32 %v159, %v587
  %589 = vdwg.mxu0
  %590 = vmatprep.subr.mxu0 %v83
  %591 = vmatpush1.msra.mxu0 %v82
  %592 = vmatprep.subr.mxu0 %v79
  %593 = vmatpush1.msra.mxu0 %v78
  %594 = vmatprep.subr.mxu0 %v75
  %595 = vmatpush1.msra.mxu0 %v74
  %596 = vmatprep.subr.mxu0 %v71
  %597 = vmatpush1.msra.mxu0 %v70
  %598 = vmatprep.subr.mxu0 %v67
  %599 = vmatpush1.msra.mxu0 %v66
  %600 = vmatprep.subr.mxu0 %v63
  %601 = vmatpush1.msra.mxu0 %v62
  %602 = vmatprep.subr.mxu0 %v59
  %603 = vmatpush1.msra.mxu0 %v58
  %604 = vmatprep.subr.mxu0 %v55
  %605 = vmatpush1.msra.mxu0 %v54
  %606 = vmatprep.subr.mxu0 %v51
  %607 = vmatpush1.msra.mxu0 %v50
  %608 = vmatprep.subr.mxu0 %v47
  %609 = vmatpush1.msra.mxu0 %v46
  %610 = vmatprep.subr.mxu0 %v43
  %611 = vmatpush1.msra.mxu0 %v42
  %612 = vmatprep.subr.mxu0 %v39
  %613 = vmatpush1.msra.mxu0 %v38
  %614 = vmatprep.subr.mxu0 %v35
  %615 = vmatpush1.msra.mxu0 %v34
  %616 = vmatprep.subr.mxu0 %v31
  %617 = vmatpush1.msra.mxu0 %v30
  %618 = vmatprep.subr.mxu0 %v27
  %619 = vmatpush1.msra.mxu0 %v26
  %620 = vmatprep.subr.mxu0 %v23
  %621 = vmatpush1.msra.mxu0 %v22
  %622 = vmatprep.subr.mxu0 %v147
  %623 = vmatpush2.msra.mxu0 %v146
  %624 = vmatprep.subr.mxu0 %v143
  %625 = vmatpush2.msra.mxu0 %v142
  %626 = vmatprep.subr.mxu0 %v139
  %627 = vmatpush2.msra.mxu0 %v138
  %628 = vmatprep.subr.mxu0 %v135
  %629 = vmatpush2.msra.mxu0 %v134
  %630 = vmatprep.subr.mxu0 %v131
  %631 = vmatpush2.msra.mxu0 %v130
  %632 = vmatprep.subr.mxu0 %v127
  %633 = vmatpush2.msra.mxu0 %v126
  %634 = vmatprep.subr.mxu0 %v123
  %635 = vmatpush2.msra.mxu0 %v122
  %636 = vmatprep.subr.mxu0 %v119
  %637 = vmatpush2.msra.mxu0 %v118
  %638 = vmatprep.subr.mxu0 %v115
  %639 = vmatpush2.msra.mxu0 %v114
  %640 = vmatprep.subr.mxu0 %v111
  %641 = vmatpush2.msra.mxu0 %v110
  %642 = vmatprep.subr.mxu0 %v107
  %643 = vmatpush2.msra.mxu0 %v106
  %644 = vmatprep.subr.mxu0 %v103
  %645 = vmatpush2.msra.mxu0 %v102
  %646 = vmatprep.subr.mxu0 %v99
  %647 = vmatpush2.msra.mxu0 %v98
  %648 = vmatprep.subr.mxu0 %v95
  %649 = vmatpush2.msra.mxu0 %v94
  %650 = vmatprep.subr.mxu0 %v91
  %651 = vmatpush2.msra.mxu0 %v90
  %652 = vmatprep.subr.mxu0 %v87
  %653 = vmatpush2.msra.mxu0 %v86
  %654 = vmatprep.mubr.f32.mxu0 %v518
  %655 = vmatmul.mubr.f32.gmra.mxu0 %v517
  %v656 = vpop.f32.mrf.mxu0
  %v657 = vadd.f32 %v163, %v656
  %v658 = vpop.f32.mrf.mxu0
  %v659 = vadd.f32 %v167, %v658
  %660 = vdwg.mxu0
  %v661 = vxor.u32 %v586, 2147483648
  %v662 = vmul.f32 %v661, 1.442695
  %v663 = vpow.pop %v662
  %v664 = vadd.f32 %v663, 1.0
  %v665 = vrcp.pop %v664
  %v666 = vmul.f32 1.0, %v665
  %v667 = vxor.u32 %v588, 2147483648
  %v668 = vmul.f32 %v667, 1.442695
  %v669 = vpow.pop %v668
  %v670 = vadd.f32 %v669, 1.0
  %v671 = vrcp.pop %v670
  %v672 = vmul.f32 1.0, %v671
  %v673 = vtanh.pop %v657
  %v674 = vxor.u32 %v659, 2147483648
  %v675 = vmul.f32 %v674, 1.442695
  %v676 = vpow.pop %v675
  %v677 = vadd.f32 %v676, 1.0
  %v678 = vrcp.pop %v677
  %v679 = vmul.f32 1.0, %v678
  %v680 = vld [vmem:[#allocation3] sm:$0xff]
  %v681 = vmul.f32 %v672, %v680
  %v682 = vmul.f32 %v666, %v673
  %v683 = vadd.f32 %v681, %v682
  %v684 = vtanh.pop %v683
  %v685 = vmul.f32 %v679, %v684
  %686 = vst [vmem:[#allocation3] sm:$0xff] %v683
  %687 = vst [vmem:[#allocation2] sm:$0xff] %v685
  %s688 = scalar_lea.vmem %s3, 16
  %689 = vst [vmem:[%s688] sm:$0xff] %v685
  %s690 = scalar_lea.vmem %s0, 24
  %v691 = vld [vmem:[%s690] sm:$0xff]
  %v692 = vld [vmem:[#allocation2] sm:$0xff]
  %693 = vmatprep.subr.mxu0 %v81
  %694 = vmatpush1.msra.mxu0 %v80
  %695 = vmatprep.subr.mxu0 %v77
  %696 = vmatpush1.msra.mxu0 %v76
  %697 = vmatprep.subr.mxu0 %v73
  %698 = vmatpush1.msra.mxu0 %v72
  %699 = vmatprep.subr.mxu0 %v69
  %700 = vmatpush1.msra.mxu0 %v68
  %701 = vmatprep.subr.mxu0 %v65
  %702 = vmatpush1.msra.mxu0 %v64
  %703 = vmatprep.subr.mxu0 %v61
  %704 = vmatpush1.msra.mxu0 %v60
  %705 = vmatprep.subr.mxu0 %v57
  %706 = vmatpush1.msra.mxu0 %v56
  %707 = vmatprep.subr.mxu0 %v53
  %708 = vmatpush1.msra.mxu0 %v52
  %709 = vmatprep.subr.mxu0 %v49
  %710 = vmatpush1.msra.mxu0 %v48
  %711 = vmatprep.subr.mxu0 %v45
  %712 = vmatpush1.msra.mxu0 %v44
  %713 = vmatprep.subr.mxu0 %v41
  %714 = vmatpush1.msra.mxu0 %v40
  %715 = vmatprep.subr.mxu0 %v37
  %716 = vmatpush1.msra.mxu0 %v36
  %717 = vmatprep.subr.mxu0 %v33
  %718 = vmatpush1.msra.mxu0 %v32
  %719 = vmatprep.subr.mxu0 %v29
  %720 = vmatpush1.msra.mxu0 %v28
  %721 = vmatprep.subr.mxu0 %v25
  %722 = vmatpush1.msra.mxu0 %v24
  %723 = vmatprep.subr.mxu0 %v21
  %724 = vmatpush1.msra.mxu0 %v20
  %725 = vmatprep.subr.mxu0 %v145
  %726 = vmatpush2.msra.mxu0 %v144
  %727 = vmatprep.subr.mxu0 %v141
  %728 = vmatpush2.msra.mxu0 %v140
  %729 = vmatprep.subr.mxu0 %v137
  %730 = vmatpush2.msra.mxu0 %v136
  %731 = vmatprep.subr.mxu0 %v133
  %732 = vmatpush2.msra.mxu0 %v132
  %733 = vmatprep.subr.mxu0 %v129
  %734 = vmatpush2.msra.mxu0 %v128
  %735 = vmatprep.subr.mxu0 %v125
  %736 = vmatpush2.msra.mxu0 %v124
  %737 = vmatprep.subr.mxu0 %v121
  %738 = vmatpush2.msra.mxu0 %v120
  %739 = vmatprep.subr.mxu0 %v117
  %740 = vmatpush2.msra.mxu0 %v116
  %741 = vmatprep.subr.mxu0 %v113
  %742 = vmatpush2.msra.mxu0 %v112
  %743 = vmatprep.subr.mxu0 %v109
  %744 = vmatpush2.msra.mxu0 %v108
  %745 = vmatprep.subr.mxu0 %v105
  %746 = vmatpush2.msra.mxu0 %v104
  %747 = vmatprep.subr.mxu0 %v101
  %748 = vmatpush2.msra.mxu0 %v100
  %749 = vmatprep.subr.mxu0 %v97
  %750 = vmatpush2.msra.mxu0 %v96
  %751 = vmatprep.subr.mxu0 %v93
  %752 = vmatpush2.msra.mxu0 %v92
  %753 = vmatprep.subr.mxu0 %v89
  %754 = vmatpush2.msra.mxu0 %v88
  %755 = vmatprep.subr.mxu0 %v85
  %756 = vmatpush2.msra.mxu0 %v84
  %757 = vmatprep.mubr.f32.mxu0 %v692
  %758 = vmatmul.mubr.f32.gmra.mxu0 %v691
  %v759 = vpop.f32.mrf.mxu0
  %v760 = vadd.f32 %v155, %v759
  %v761 = vpop.f32.mrf.mxu0
  %v762 = vadd.f32 %v159, %v761
  %763 = vdwg.mxu0
  %764 = vmatprep.subr.mxu0 %v83
  %765 = vmatpush1.msra.mxu0 %v82
  %766 = vmatprep.subr.mxu0 %v79
  %767 = vmatpush1.msra.mxu0 %v78
  %768 = vmatprep.subr.mxu0 %v75
  %769 = vmatpush1.msra.mxu0 %v74
  %770 = vmatprep.subr.mxu0 %v71
  %771 = vmatpush1.msra.mxu0 %v70
  %772 = vmatprep.subr.mxu0 %v67
  %773 = vmatpush1.msra.mxu0 %v66
  %774 = vmatprep.subr.mxu0 %v63
  %775 = vmatpush1.msra.mxu0 %v62
  %776 = vmatprep.subr.mxu0 %v59
  %777 = vmatpush1.msra.mxu0 %v58
  %778 = vmatprep.subr.mxu0 %v55
  %779 = vmatpush1.msra.mxu0 %v54
  %780 = vmatprep.subr.mxu0 %v51
  %781 = vmatpush1.msra.mxu0 %v50
  %782 = vmatprep.subr.mxu0 %v47
  %783 = vmatpush1.msra.mxu0 %v46
  %784 = vmatprep.subr.mxu0 %v43
  %785 = vmatpush1.msra.mxu0 %v42
  %786 = vmatprep.subr.mxu0 %v39
  %787 = vmatpush1.msra.mxu0 %v38
  %788 = vmatprep.subr.mxu0 %v35
  %789 = vmatpush1.msra.mxu0 %v34
  %790 = vmatprep.subr.mxu0 %v31
  %791 = vmatpush1.msra.mxu0 %v30
  %792 = vmatprep.subr.mxu0 %v27
  %793 = vmatpush1.msra.mxu0 %v26
  %794 = vmatprep.subr.mxu0 %v23
  %795 = vmatpush1.msra.mxu0 %v22
  %796 = vmatprep.subr.mxu0 %v147
  %797 = vmatpush2.msra.mxu0 %v146
  %798 = vmatprep.subr.mxu0 %v143
  %799 = vmatpush2.msra.mxu0 %v142
  %800 = vmatprep.subr.mxu0 %v139
  %801 = vmatpush2.msra.mxu0 %v138
  %802 = vmatprep.subr.mxu0 %v135
  %803 = vmatpush2.msra.mxu0 %v134
  %804 = vmatprep.subr.mxu0 %v131
  %805 = vmatpush2.msra.mxu0 %v130
  %806 = vmatprep.subr.mxu0 %v127
  %807 = vmatpush2.msra.mxu0 %v126
  %808 = vmatprep.subr.mxu0 %v123
  %809 = vmatpush2.msra.mxu0 %v122
  %810 = vmatprep.subr.mxu0 %v119
  %811 = vmatpush2.msra.mxu0 %v118
  %812 = vmatprep.subr.mxu0 %v115
  %813 = vmatpush2.msra.mxu0 %v114
  %814 = vmatprep.subr.mxu0 %v111
  %815 = vmatpush2.msra.mxu0 %v110
  %816 = vmatprep.subr.mxu0 %v107
  %817 = vmatpush2.msra.mxu0 %v106
  %818 = vmatprep.subr.mxu0 %v103
  %819 = vmatpush2.msra.mxu0 %v102
  %820 = vmatprep.subr.mxu0 %v99
  %821 = vmatpush2.msra.mxu0 %v98
  %822 = vmatprep.subr.mxu0 %v95
  %823 = vmatpush2.msra.mxu0 %v94
  %824 = vmatprep.subr.mxu0 %v91
  %825 = vmatpush2.msra.mxu0 %v90
  %826 = vmatprep.subr.mxu0 %v87
  %827 = vmatpush2.msra.mxu0 %v86
  %828 = vmatprep.mubr.f32.mxu0 %v692
  %829 = vmatmul.mubr.f32.gmra.mxu0 %v691
  %v830 = vpop.f32.mrf.mxu0
  %v831 = vadd.f32 %v163, %v830
  %v832 = vpop.f32.mrf.mxu0
  %v833 = vadd.f32 %v167, %v832
  %834 = vdwg.mxu0
  %v835 = vxor.u32 %v760, 2147483648
  %v836 = vmul.f32 %v835, 1.442695
  %v837 = vpow.pop %v836
  %v838 = vadd.f32 %v837, 1.0
  %v839 = vrcp.pop %v838
  %v840 = vmul.f32 1.0, %v839
  %v841 = vxor.u32 %v762, 2147483648
  %v842 = vmul.f32 %v841, 1.442695
  %v843 = vpow.pop %v842
  %v844 = vadd.f32 %v843, 1.0
  %v845 = vrcp.pop %v844
  %v846 = vmul.f32 1.0, %v845
  %v847 = vtanh.pop %v831
  %v848 = vxor.u32 %v833, 2147483648
  %v849 = vmul.f32 %v848, 1.442695
  %v850 = vpow.pop %v849
  %v851 = vadd.f32 %v850, 1.0
  %v852 = vrcp.pop %v851
  %v853 = vmul.f32 1.0, %v852
  %v854 = vld [vmem:[#allocation3] sm:$0xff]
  %v855 = vmul.f32 %v846, %v854
  %v856 = vmul.f32 %v840, %v847
  %v857 = vadd.f32 %v855, %v856
  %v858 = vtanh.pop %v857
  %v859 = vmul.f32 %v853, %v858
  %860 = vst [vmem:[#allocation3] sm:$0xff] %v857
  %861 = vst [vmem:[#allocation2] sm:$0xff] %v859
  %s862 = scalar_lea.vmem %s3, 24
  %863 = vst [vmem:[%s862] sm:$0xff] %v859
  %s864 = scalar_lea.vmem %s0, 32
  %v865 = vld [vmem:[%s864] sm:$0xff]
  %v866 = vld [vmem:[#allocation2] sm:$0xff]
  %867 = vmatprep.subr.mxu0 %v81
  %868 = vmatpush1.msra.mxu0 %v80
  %869 = vmatprep.subr.mxu0 %v77
  %870 = vmatpush1.msra.mxu0 %v76
  %871 = vmatprep.subr.mxu0 %v73
  %872 = vmatpush1.msra.mxu0 %v72
  %873 = vmatprep.subr.mxu0 %v69
  %874 = vmatpush1.msra.mxu0 %v68
  %875 = vmatprep.subr.mxu0 %v65
  %876 = vmatpush1.msra.mxu0 %v64
  %877 = vmatprep.subr.mxu0 %v61
  %878 = vmatpush1.msra.mxu0 %v60
  %879 = vmatprep.subr.mxu0 %v57
  %880 = vmatpush1.msra.mxu0 %v56
  %881 = vmatprep.subr.mxu0 %v53
  %882 = vmatpush1.msra.mxu0 %v52
  %883 = vmatprep.subr.mxu0 %v49
  %884 = vmatpush1.msra.mxu0 %v48
  %885 = vmatprep.subr.mxu0 %v45
  %886 = vmatpush1.msra.mxu0 %v44
  %887 = vmatprep.subr.mxu0 %v41
  %888 = vmatpush1.msra.mxu0 %v40
  %889 = vmatprep.subr.mxu0 %v37
  %890 = vmatpush1.msra.mxu0 %v36
  %891 = vmatprep.subr.mxu0 %v33
  %892 = vmatpush1.msra.mxu0 %v32
  %893 = vmatprep.subr.mxu0 %v29
  %894 = vmatpush1.msra.mxu0 %v28
  %895 = vmatprep.subr.mxu0 %v25
  %896 = vmatpush1.msra.mxu0 %v24
  %897 = vmatprep.subr.mxu0 %v21
  %898 = vmatpush1.msra.mxu0 %v20
  %899 = vmatprep.subr.mxu0 %v145
  %900 = vmatpush2.msra.mxu0 %v144
  %901 = vmatprep.subr.mxu0 %v141
  %902 = vmatpush2.msra.mxu0 %v140
  %903 = vmatprep.subr.mxu0 %v137
  %904 = vmatpush2.msra.mxu0 %v136
  %905 = vmatprep.subr.mxu0 %v133
  %906 = vmatpush2.msra.mxu0 %v132
  %907 = vmatprep.subr.mxu0 %v129
  %908 = vmatpush2.msra.mxu0 %v128
  %909 = vmatprep.subr.mxu0 %v125
  %910 = vmatpush2.msra.mxu0 %v124
  %911 = vmatprep.subr.mxu0 %v121
  %912 = vmatpush2.msra.mxu0 %v120
  %913 = vmatprep.subr.mxu0 %v117
  %914 = vmatpush2.msra.mxu0 %v116
  %915 = vmatprep.subr.mxu0 %v113
  %916 = vmatpush2.msra.mxu0 %v112
  %917 = vmatprep.subr.mxu0 %v109
  %918 = vmatpush2.msra.mxu0 %v108
  %919 = vmatprep.subr.mxu0 %v105
  %920 = vmatpush2.msra.mxu0 %v104
  %921 = vmatprep.subr.mxu0 %v101
  %922 = vmatpush2.msra.mxu0 %v100
  %923 = vmatprep.subr.mxu0 %v97
  %924 = vmatpush2.msra.mxu0 %v96
  %925 = vmatprep.subr.mxu0 %v93
  %926 = vmatpush2.msra.mxu0 %v92
  %927 = vmatprep.subr.mxu0 %v89
  %928 = vmatpush2.msra.mxu0 %v88
  %929 = vmatprep.subr.mxu0 %v85
  %930 = vmatpush2.msra.mxu0 %v84
  %931 = vmatprep.mubr.f32.mxu0 %v866
  %932 = vmatmul.mubr.f32.gmra.mxu0 %v865
  %v933 = vpop.f32.mrf.mxu0
  %v934 = vadd.f32 %v155, %v933
  %v935 = vpop.f32.mrf.mxu0
  %v936 = vadd.f32 %v159, %v935
  %937 = vdwg.mxu0
  %938 = vmatprep.subr.mxu0 %v83
  %939 = vmatpush1.msra.mxu0 %v82
  %940 = vmatprep.subr.mxu0 %v79
  %941 = vmatpush1.msra.mxu0 %v78
  %942 = vmatprep.subr.mxu0 %v75
  %943 = vmatpush1.msra.mxu0 %v74
  %944 = vmatprep.subr.mxu0 %v71
  %945 = vmatpush1.msra.mxu0 %v70
  %946 = vmatprep.subr.mxu0 %v67
  %947 = vmatpush1.msra.mxu0 %v66
  %948 = vmatprep.subr.mxu0 %v63
  %949 = vmatpush1.msra.mxu0 %v62
  %950 = vmatprep.subr.mxu0 %v59
  %951 = vmatpush1.msra.mxu0 %v58
  %952 = vmatprep.subr.mxu0 %v55
  %953 = vmatpush1.msra.mxu0 %v54
  %954 = vmatprep.subr.mxu0 %v51
  %955 = vmatpush1.msra.mxu0 %v50
  %956 = vmatprep.subr.mxu0 %v47
  %957 = vmatpush1.msra.mxu0 %v46
  %958 = vmatprep.subr.mxu0 %v43
  %959 = vmatpush1.msra.mxu0 %v42
  %960 = vmatprep.subr.mxu0 %v39
  %961 = vmatpush1.msra.mxu0 %v38
  %962 = vmatprep.subr.mxu0 %v35
  %963 = vmatpush1.msra.mxu0 %v34
  %964 = vmatprep.subr.mxu0 %v31
  %965 = vmatpush1.msra.mxu0 %v30
  %966 = vmatprep.subr.mxu0 %v27
  %967 = vmatpush1.msra.mxu0 %v26
  %968 = vmatprep.subr.mxu0 %v23
  %969 = vmatpush1.msra.mxu0 %v22
  %970 = vmatprep.subr.mxu0 %v147
  %971 = vmatpush2.msra.mxu0 %v146
  %972 = vmatprep.subr.mxu0 %v143
  %973 = vmatpush2.msra.mxu0 %v142
  %974 = vmatprep.subr.mxu0 %v139
  %975 = vmatpush2.msra.mxu0 %v138
  %976 = vmatprep.subr.mxu0 %v135
  %977 = vmatpush2.msra.mxu0 %v134
  %978 = vmatprep.subr.mxu0 %v131
  %979 = vmatpush2.msra.mxu0 %v130
  %980 = vmatprep.subr.mxu0 %v127
  %981 = vmatpush2.msra.mxu0 %v126
  %982 = vmatprep.subr.mxu0 %v123
  %983 = vmatpush2.msra.mxu0 %v122
  %984 = vmatprep.subr.mxu0 %v119
  %985 = vmatpush2.msra.mxu0 %v118
  %986 = vmatprep.subr.mxu0 %v115
  %987 = vmatpush2.msra.mxu0 %v114
  %988 = vmatprep.subr.mxu0 %v111
  %989 = vmatpush2.msra.mxu0 %v110
  %990 = vmatprep.subr.mxu0 %v107
  %991 = vmatpush2.msra.mxu0 %v106
  %992 = vmatprep.subr.mxu0 %v103
  %993 = vmatpush2.msra.mxu0 %v102
  %994 = vmatprep.subr.mxu0 %v99
  %995 = vmatpush2.msra.mxu0 %v98
  %996 = vmatprep.subr.mxu0 %v95
  %997 = vmatpush2.msra.mxu0 %v94
  %998 = vmatprep.subr.mxu0 %v91
  %999 = vmatpush2.msra.mxu0 %v90
  %1000 = vmatprep.subr.mxu0 %v87
  %1001 = vmatpush2.msra.mxu0 %v86
  %1002 = vmatprep.mubr.f32.mxu0 %v866
  %1003 = vmatmul.mubr.f32.gmra.mxu0 %v865
  %v1004 = vpop.f32.mrf.mxu0
  %v1005 = vadd.f32 %v163, %v1004
  %v1006 = vpop.f32.mrf.mxu0
  %v1007 = vadd.f32 %v167, %v1006
  %1008 = vdwg.mxu0
  %v1009 = vxor.u32 %v934, 2147483648
  %v1010 = vmul.f32 %v1009, 1.442695
  %v1011 = vpow.pop %v1010
  %v1012 = vadd.f32 %v1011, 1.0
  %v1013 = vrcp.pop %v1012
  %v1014 = vmul.f32 1.0, %v1013
  %v1015 = vxor.u32 %v936, 2147483648
  %v1016 = vmul.f32 %v1015, 1.442695
  %v1017 = vpow.pop %v1016
  %v1018 = vadd.f32 %v1017, 1.0
  %v1019 = vrcp.pop %v1018
  %v1020 = vmul.f32 1.0, %v1019
  %v1021 = vtanh.pop %v1005
  %v1022 = vxor.u32 %v1007, 2147483648
  %v1023 = vmul.f32 %v1022, 1.442695
  %v1024 = vpow.pop %v1023
  %v1025 = vadd.f32 %v1024, 1.0
  %v1026 = vrcp.pop %v1025
  %v1027 = vmul.f32 1.0, %v1026
  %v1028 = vld [vmem:[#allocation3] sm:$0xff]
  %v1029 = vmul.f32 %v1020, %v1028
  %v1030 = vmul.f32 %v1014, %v1021
  %v1031 = vadd.f32 %v1029, %v1030
  %v1032 = vtanh.pop %v1031
  %v1033 = vmul.f32 %v1027, %v1032
  %1034 = vst [vmem:[#allocation3] sm:$0xff] %v1031
  %1035 = vst [vmem:[#allocation2] sm:$0xff] %v1033
  %s1036 = scalar_lea.vmem %s3, 32
  %1037 = vst [vmem:[%s1036] sm:$0xff] %v1033
  %s1038 = scalar_lea.vmem %s0, 40
  %v1039 = vld [vmem:[%s1038] sm:$0xff]
  %v1040 = vld [vmem:[#allocation2] sm:$0xff]
  %1041 = vmatprep.subr.mxu0 %v81
  %1042 = vmatpush1.msra.mxu0 %v80
  %1043 = vmatprep.subr.mxu0 %v77
  %1044 = vmatpush1.msra.mxu0 %v76
  %1045 = vmatprep.subr.mxu0 %v73
  %1046 = vmatpush1.msra.mxu0 %v72
  %1047 = vmatprep.subr.mxu0 %v69
  %1048 = vmatpush1.msra.mxu0 %v68
  %1049 = vmatprep.subr.mxu0 %v65
  %1050 = vmatpush1.msra.mxu0 %v64
  %1051 = vmatprep.subr.mxu0 %v61
  %1052 = vmatpush1.msra.mxu0 %v60
  %1053 = vmatprep.subr.mxu0 %v57
  %1054 = vmatpush1.msra.mxu0 %v56
  %1055 = vmatprep.subr.mxu0 %v53
  %1056 = vmatpush1.msra.mxu0 %v52
  %1057 = vmatprep.subr.mxu0 %v49
  %1058 = vmatpush1.msra.mxu0 %v48
  %1059 = vmatprep.subr.mxu0 %v45
  %1060 = vmatpush1.msra.mxu0 %v44
  %1061 = vmatprep.subr.mxu0 %v41
  %1062 = vmatpush1.msra.mxu0 %v40
  %1063 = vmatprep.subr.mxu0 %v37
  %1064 = vmatpush1.msra.mxu0 %v36
  %1065 = vmatprep.subr.mxu0 %v33
  %1066 = vmatpush1.msra.mxu0 %v32
  %1067 = vmatprep.subr.mxu0 %v29
  %1068 = vmatpush1.msra.mxu0 %v28
  %1069 = vmatprep.subr.mxu0 %v25
  %1070 = vmatpush1.msra.mxu0 %v24
  %1071 = vmatprep.subr.mxu0 %v21
  %1072 = vmatpush1.msra.mxu0 %v20
  %1073 = vmatprep.subr.mxu0 %v145
  %1074 = vmatpush2.msra.mxu0 %v144
  %1075 = vmatprep.subr.mxu0 %v141
  %1076 = vmatpush2.msra.mxu0 %v140
  %1077 = vmatprep.subr.mxu0 %v137
  %1078 = vmatpush2.msra.mxu0 %v136
  %1079 = vmatprep.subr.mxu0 %v133
  %1080 = vmatpush2.msra.mxu0 %v132
  %1081 = vmatprep.subr.mxu0 %v129
  %1082 = vmatpush2.msra.mxu0 %v128
  %1083 = vmatprep.subr.mxu0 %v125
  %1084 = vmatpush2.msra.mxu0 %v124
  %1085 = vmatprep.subr.mxu0 %v121
  %1086 = vmatpush2.msra.mxu0 %v120
  %1087 = vmatprep.subr.mxu0 %v117
  %1088 = vmatpush2.msra.mxu0 %v116
  %1089 = vmatprep.subr.mxu0 %v113
  %1090 = vmatpush2.msra.mxu0 %v112
  %1091 = vmatprep.subr.mxu0 %v109
  %1092 = vmatpush2.msra.mxu0 %v108
  %1093 = vmatprep.subr.mxu0 %v105
  %1094 = vmatpush2.msra.mxu0 %v104
  %1095 = vmatprep.subr.mxu0 %v101
  %1096 = vmatpush2.msra.mxu0 %v100
  %1097 = vmatprep.subr.mxu0 %v97
  %1098 = vmatpush2.msra.mxu0 %v96
  %1099 = vmatprep.subr.mxu0 %v93
  %1100 = vmatpush2.msra.mxu0 %v92
  %1101 = vmatprep.subr.mxu0 %v89
  %1102 = vmatpush2.msra.mxu0 %v88
  %1103 = vmatprep.subr.mxu0 %v85
  %1104 = vmatpush2.msra.mxu0 %v84
  %1105 = vmatprep.mubr.f32.mxu0 %v1040
  %1106 = vmatmul.mubr.f32.gmra.mxu0 %v1039
  %v1107 = vpop.f32.mrf.mxu0
  %v1108 = vadd.f32 %v155, %v1107
  %v1109 = vpop.f32.mrf.mxu0
  %v1110 = vadd.f32 %v159, %v1109
  %1111 = vdwg.mxu0
  %1112 = vmatprep.subr.mxu0 %v83
  %1113 = vmatpush1.msra.mxu0 %v82
  %1114 = vmatprep.subr.mxu0 %v79
  %1115 = vmatpush1.msra.mxu0 %v78
  %1116 = vmatprep.subr.mxu0 %v75
  %1117 = vmatpush1.msra.mxu0 %v74
  %1118 = vmatprep.subr.mxu0 %v71
  %1119 = vmatpush1.msra.mxu0 %v70
  %1120 = vmatprep.subr.mxu0 %v67
  %1121 = vmatpush1.msra.mxu0 %v66
  %1122 = vmatprep.subr.mxu0 %v63
  %1123 = vmatpush1.msra.mxu0 %v62
  %1124 = vmatprep.subr.mxu0 %v59
  %1125 = vmatpush1.msra.mxu0 %v58
  %1126 = vmatprep.subr.mxu0 %v55
  %1127 = vmatpush1.msra.mxu0 %v54
  %1128 = vmatprep.subr.mxu0 %v51
  %1129 = vmatpush1.msra.mxu0 %v50
  %1130 = vmatprep.subr.mxu0 %v47
  %1131 = vmatpush1.msra.mxu0 %v46
  %1132 = vmatprep.subr.mxu0 %v43
  %1133 = vmatpush1.msra.mxu0 %v42
  %1134 = vmatprep.subr.mxu0 %v39
  %1135 = vmatpush1.msra.mxu0 %v38
  %1136 = vmatprep.subr.mxu0 %v35
  %1137 = vmatpush1.msra.mxu0 %v34
  %1138 = vmatprep.subr.mxu0 %v31
  %1139 = vmatpush1.msra.mxu0 %v30
  %1140 = vmatprep.subr.mxu0 %v27
  %1141 = vmatpush1.msra.mxu0 %v26
  %1142 = vmatprep.subr.mxu0 %v23
  %1143 = vmatpush1.msra.mxu0 %v22
  %1144 = vmatprep.subr.mxu0 %v147
  %1145 = vmatpush2.msra.mxu0 %v146
  %1146 = vmatprep.subr.mxu0 %v143
  %1147 = vmatpush2.msra.mxu0 %v142
  %1148 = vmatprep.subr.mxu0 %v139
  %1149 = vmatpush2.msra.mxu0 %v138
  %1150 = vmatprep.subr.mxu0 %v135
  %1151 = vmatpush2.msra.mxu0 %v134
  %1152 = vmatprep.subr.mxu0 %v131
  %1153 = vmatpush2.msra.mxu0 %v130
  %1154 = vmatprep.subr.mxu0 %v127
  %1155 = vmatpush2.msra.mxu0 %v126
  %1156 = vmatprep.subr.mxu0 %v123
  %1157 = vmatpush2.msra.mxu0 %v122
  %1158 = vmatprep.subr.mxu0 %v119
  %1159 = vmatpush2.msra.mxu0 %v118
  %1160 = vmatprep.subr.mxu0 %v115
  %1161 = vmatpush2.msra.mxu0 %v114
  %1162 = vmatprep.subr.mxu0 %v111
  %1163 = vmatpush2.msra.mxu0 %v110
  %1164 = vmatprep.subr.mxu0 %v107
  %1165 = vmatpush2.msra.mxu0 %v106
  %1166 = vmatprep.subr.mxu0 %v103
  %1167 = vmatpush2.msra.mxu0 %v102
  %1168 = vmatprep.subr.mxu0 %v99
  %1169 = vmatpush2.msra.mxu0 %v98
  %1170 = vmatprep.subr.mxu0 %v95
  %1171 = vmatpush2.msra.mxu0 %v94
  %1172 = vmatprep.subr.mxu0 %v91
  %1173 = vmatpush2.msra.mxu0 %v90
  %1174 = vmatprep.subr.mxu0 %v87
  %1175 = vmatpush2.msra.mxu0 %v86
  %1176 = vmatprep.mubr.f32.mxu0 %v1040
  %1177 = vmatmul.mubr.f32.gmra.mxu0 %v1039
  %v1178 = vpop.f32.mrf.mxu0
  %v1179 = vadd.f32 %v163, %v1178
  %v1180 = vpop.f32.mrf.mxu0
  %v1181 = vadd.f32 %v167, %v1180
  %1182 = vdwg.mxu0
  %v1183 = vxor.u32 %v1108, 2147483648
  %v1184 = vmul.f32 %v1183, 1.442695
  %v1185 = vpow.pop %v1184
  %v1186 = vadd.f32 %v1185, 1.0
  %v1187 = vrcp.pop %v1186
  %v1188 = vmul.f32 1.0, %v1187
  %v1189 = vxor.u32 %v1110, 2147483648
  %v1190 = vmul.f32 %v1189, 1.442695
  %v1191 = vpow.pop %v1190
  %v1192 = vadd.f32 %v1191, 1.0
  %v1193 = vrcp.pop %v1192
  %v1194 = vmul.f32 1.0, %v1193
  %v1195 = vtanh.pop %v1179
  %v1196 = vxor.u32 %v1181, 2147483648
  %v1197 = vmul.f32 %v1196, 1.442695
  %v1198 = vpow.pop %v1197
  %v1199 = vadd.f32 %v1198, 1.0
  %v1200 = vrcp.pop %v1199
  %v1201 = vmul.f32 1.0, %v1200
  %v1202 = vld [vmem:[#allocation3] sm:$0xff]
  %v1203 = vmul.f32 %v1194, %v1202
  %v1204 = vmul.f32 %v1188, %v1195
  %v1205 = vadd.f32 %v1203, %v1204
  %v1206 = vtanh.pop %v1205
  %v1207 = vmul.f32 %v1201, %v1206
  %1208 = vst [vmem:[#allocation3] sm:$0xff] %v1205
  %1209 = vst [vmem:[#allocation2] sm:$0xff] %v1207
  %s1210 = scalar_lea.vmem %s3, 40
  %1211 = vst [vmem:[%s1210] sm:$0xff] %v1207
  %s1212 = scalar_lea.vmem %s0, 48
  %v1213 = vld [vmem:[%s1212] sm:$0xff]
  %v1214 = vld [vmem:[#allocation2] sm:$0xff]
  %1215 = vmatprep.subr.mxu0 %v81
  %1216 = vmatpush1.msra.mxu0 %v80
  %1217 = vmatprep.subr.mxu0 %v77
  %1218 = vmatpush1.msra.mxu0 %v76
  %1219 = vmatprep.subr.mxu0 %v73
  %1220 = vmatpush1.msra.mxu0 %v72
  %1221 = vmatprep.subr.mxu0 %v69
  %1222 = vmatpush1.msra.mxu0 %v68
  %1223 = vmatprep.subr.mxu0 %v65
  %1224 = vmatpush1.msra.mxu0 %v64
  %1225 = vmatprep.subr.mxu0 %v61
  %1226 = vmatpush1.msra.mxu0 %v60
  %1227 = vmatprep.subr.mxu0 %v57
  %1228 = vmatpush1.msra.mxu0 %v56
  %1229 = vmatprep.subr.mxu0 %v53
  %1230 = vmatpush1.msra.mxu0 %v52
  %1231 = vmatprep.subr.mxu0 %v49
  %1232 = vmatpush1.msra.mxu0 %v48
  %1233 = vmatprep.subr.mxu0 %v45
  %1234 = vmatpush1.msra.mxu0 %v44
  %1235 = vmatprep.subr.mxu0 %v41
  %1236 = vmatpush1.msra.mxu0 %v40
  %1237 = vmatprep.subr.mxu0 %v37
  %1238 = vmatpush1.msra.mxu0 %v36
  %1239 = vmatprep.subr.mxu0 %v33
  %1240 = vmatpush1.msra.mxu0 %v32
  %1241 = vmatprep.subr.mxu0 %v29
  %1242 = vmatpush1.msra.mxu0 %v28
  %1243 = vmatprep.subr.mxu0 %v25
  %1244 = vmatpush1.msra.mxu0 %v24
  %1245 = vmatprep.subr.mxu0 %v21
  %1246 = vmatpush1.msra.mxu0 %v20
  %1247 = vmatprep.subr.mxu0 %v145
  %1248 = vmatpush2.msra.mxu0 %v144
  %1249 = vmatprep.subr.mxu0 %v141
  %1250 = vmatpush2.msra.mxu0 %v140
  %1251 = vmatprep.subr.mxu0 %v137
  %1252 = vmatpush2.msra.mxu0 %v136
  %1253 = vmatprep.subr.mxu0 %v133
  %1254 = vmatpush2.msra.mxu0 %v132
  %1255 = vmatprep.subr.mxu0 %v129
  %1256 = vmatpush2.msra.mxu0 %v128
  %1257 = vmatprep.subr.mxu0 %v125
  %1258 = vmatpush2.msra.mxu0 %v124
  %1259 = vmatprep.subr.mxu0 %v121
  %1260 = vmatpush2.msra.mxu0 %v120
  %1261 = vmatprep.subr.mxu0 %v117
  %1262 = vmatpush2.msra.mxu0 %v116
  %1263 = vmatprep.subr.mxu0 %v113
  %1264 = vmatpush2.msra.mxu0 %v112
  %1265 = vmatprep.subr.mxu0 %v109
  %1266 = vmatpush2.msra.mxu0 %v108
  %1267 = vmatprep.subr.mxu0 %v105
  %1268 = vmatpush2.msra.mxu0 %v104
  %1269 = vmatprep.subr.mxu0 %v101
  %1270 = vmatpush2.msra.mxu0 %v100
  %1271 = vmatprep.subr.mxu0 %v97
  %1272 = vmatpush2.msra.mxu0 %v96
  %1273 = vmatprep.subr.mxu0 %v93
  %1274 = vmatpush2.msra.mxu0 %v92
  %1275 = vmatprep.subr.mxu0 %v89
  %1276 = vmatpush2.msra.mxu0 %v88
  %1277 = vmatprep.subr.mxu0 %v85
  %1278 = vmatpush2.msra.mxu0 %v84
  %1279 = vmatprep.mubr.f32.mxu0 %v1214
  %1280 = vmatmul.mubr.f32.gmra.mxu0 %v1213
  %v1281 = vpop.f32.mrf.mxu0
  %v1282 = vadd.f32 %v155, %v1281
  %v1283 = vpop.f32.mrf.mxu0
  %v1284 = vadd.f32 %v159, %v1283
  %1285 = vdwg.mxu0
  %1286 = vmatprep.subr.mxu0 %v83
  %1287 = vmatpush1.msra.mxu0 %v82
  %1288 = vmatprep.subr.mxu0 %v79
  %1289 = vmatpush1.msra.mxu0 %v78
  %1290 = vmatprep.subr.mxu0 %v75
  %1291 = vmatpush1.msra.mxu0 %v74
  %1292 = vmatprep.subr.mxu0 %v71
  %1293 = vmatpush1.msra.mxu0 %v70
  %1294 = vmatprep.subr.mxu0 %v67
  %1295 = vmatpush1.msra.mxu0 %v66
  %1296 = vmatprep.subr.mxu0 %v63
  %1297 = vmatpush1.msra.mxu0 %v62
  %1298 = vmatprep.subr.mxu0 %v59
  %1299 = vmatpush1.msra.mxu0 %v58
  %1300 = vmatprep.subr.mxu0 %v55
  %1301 = vmatpush1.msra.mxu0 %v54
  %1302 = vmatprep.subr.mxu0 %v51
  %1303 = vmatpush1.msra.mxu0 %v50
  %1304 = vmatprep.subr.mxu0 %v47
  %1305 = vmatpush1.msra.mxu0 %v46
  %1306 = vmatprep.subr.mxu0 %v43
  %1307 = vmatpush1.msra.mxu0 %v42
  %1308 = vmatprep.subr.mxu0 %v39
  %1309 = vmatpush1.msra.mxu0 %v38
  %1310 = vmatprep.subr.mxu0 %v35
  %1311 = vmatpush1.msra.mxu0 %v34
  %1312 = vmatprep.subr.mxu0 %v31
  %1313 = vmatpush1.msra.mxu0 %v30
  %1314 = vmatprep.subr.mxu0 %v27
  %1315 = vmatpush1.msra.mxu0 %v26
  %1316 = vmatprep.subr.mxu0 %v23
  %1317 = vmatpush1.msra.mxu0 %v22
  %1318 = vmatprep.subr.mxu0 %v147
  %1319 = vmatpush2.msra.mxu0 %v146
  %1320 = vmatprep.subr.mxu0 %v143
  %1321 = vmatpush2.msra.mxu0 %v142
  %1322 = vmatprep.subr.mxu0 %v139
  %1323 = vmatpush2.msra.mxu0 %v138
  %1324 = vmatprep.subr.mxu0 %v135
  %1325 = vmatpush2.msra.mxu0 %v134
  %1326 = vmatprep.subr.mxu0 %v131
  %1327 = vmatpush2.msra.mxu0 %v130
  %1328 = vmatprep.subr.mxu0 %v127
  %1329 = vmatpush2.msra.mxu0 %v126
  %1330 = vmatprep.subr.mxu0 %v123
  %1331 = vmatpush2.msra.mxu0 %v122
  %1332 = vmatprep.subr.mxu0 %v119
  %1333 = vmatpush2.msra.mxu0 %v118
  %1334 = vmatprep.subr.mxu0 %v115
  %1335 = vmatpush2.msra.mxu0 %v114
  %1336 = vmatprep.subr.mxu0 %v111
  %1337 = vmatpush2.msra.mxu0 %v110
  %1338 = vmatprep.subr.mxu0 %v107
  %1339 = vmatpush2.msra.mxu0 %v106
  %1340 = vmatprep.subr.mxu0 %v103
  %1341 = vmatpush2.msra.mxu0 %v102
  %1342 = vmatprep.subr.mxu0 %v99
  %1343 = vmatpush2.msra.mxu0 %v98
  %1344 = vmatprep.subr.mxu0 %v95
  %1345 = vmatpush2.msra.mxu0 %v94
  %1346 = vmatprep.subr.mxu0 %v91
  %1347 = vmatpush2.msra.mxu0 %v90
  %1348 = vmatprep.subr.mxu0 %v87
  %1349 = vmatpush2.msra.mxu0 %v86
  %1350 = vmatprep.mubr.f32.mxu0 %v1214
  %1351 = vmatmul.mubr.f32.gmra.mxu0 %v1213
  %v1352 = vpop.f32.mrf.mxu0
  %v1353 = vadd.f32 %v163, %v1352
  %v1354 = vpop.f32.mrf.mxu0
  %v1355 = vadd.f32 %v167, %v1354
  %1356 = vdwg.mxu0
  %v1357 = vxor.u32 %v1282, 2147483648
  %v1358 = vmul.f32 %v1357, 1.442695
  %v1359 = vpow.pop %v1358
  %v1360 = vadd.f32 %v1359, 1.0
  %v1361 = vrcp.pop %v1360
  %v1362 = vmul.f32 1.0, %v1361
  %v1363 = vxor.u32 %v1284, 2147483648
  %v1364 = vmul.f32 %v1363, 1.442695
  %v1365 = vpow.pop %v1364
  %v1366 = vadd.f32 %v1365, 1.0
  %v1367 = vrcp.pop %v1366
  %v1368 = vmul.f32 1.0, %v1367
  %v1369 = vtanh.pop %v1353
  %v1370 = vxor.u32 %v1355, 2147483648
  %v1371 = vmul.f32 %v1370, 1.442695
  %v1372 = vpow.pop %v1371
  %v1373 = vadd.f32 %v1372, 1.0
  %v1374 = vrcp.pop %v1373
  %v1375 = vmul.f32 1.0, %v1374
  %v1376 = vld [vmem:[#allocation3] sm:$0xff]
  %v1377 = vmul.f32 %v1368, %v1376
  %v1378 = vmul.f32 %v1362, %v1369
  %v1379 = vadd.f32 %v1377, %v1378
  %v1380 = vtanh.pop %v1379
  %v1381 = vmul.f32 %v1375, %v1380
  %1382 = vst [vmem:[#allocation3] sm:$0xff] %v1379
  %1383 = vst [vmem:[#allocation2] sm:$0xff] %v1381
  %s1384 = scalar_lea.vmem %s3, 48
  %1385 = vst [vmem:[%s1384] sm:$0xff] %v1381
  %s1386 = scalar_lea.vmem %s0, 56
  %v1387 = vld [vmem:[%s1386] sm:$0xff]
  %v1388 = vld [vmem:[#allocation2] sm:$0xff]
  %1389 = vmatprep.subr.mxu0 %v81
  %1390 = vmatpush1.msra.mxu0 %v80
  %1391 = vmatprep.subr.mxu0 %v77
  %1392 = vmatpush1.msra.mxu0 %v76
  %1393 = vmatprep.subr.mxu0 %v73
  %1394 = vmatpush1.msra.mxu0 %v72
  %1395 = vmatprep.subr.mxu0 %v69
  %1396 = vmatpush1.msra.mxu0 %v68
  %1397 = vmatprep.subr.mxu0 %v65
  %1398 = vmatpush1.msra.mxu0 %v64
  %1399 = vmatprep.subr.mxu0 %v61
  %1400 = vmatpush1.msra.mxu0 %v60
  %1401 = vmatprep.subr.mxu0 %v57
  %1402 = vmatpush1.msra.mxu0 %v56
  %1403 = vmatprep.subr.mxu0 %v53
  %1404 = vmatpush1.msra.mxu0 %v52
  %1405 = vmatprep.subr.mxu0 %v49
  %1406 = vmatpush1.msra.mxu0 %v48
  %1407 = vmatprep.subr.mxu0 %v45
  %1408 = vmatpush1.msra.mxu0 %v44
  %1409 = vmatprep.subr.mxu0 %v41
  %1410 = vmatpush1.msra.mxu0 %v40
  %1411 = vmatprep.subr.mxu0 %v37
  %1412 = vmatpush1.msra.mxu0 %v36
  %1413 = vmatprep.subr.mxu0 %v33
  %1414 = vmatpush1.msra.mxu0 %v32
  %1415 = vmatprep.subr.mxu0 %v29
  %1416 = vmatpush1.msra.mxu0 %v28
  %1417 = vmatprep.subr.mxu0 %v25
  %1418 = vmatpush1.msra.mxu0 %v24
  %1419 = vmatprep.subr.mxu0 %v21
  %1420 = vmatpush1.msra.mxu0 %v20
  %1421 = vmatprep.subr.mxu0 %v145
  %1422 = vmatpush2.msra.mxu0 %v144
  %1423 = vmatprep.subr.mxu0 %v141
  %1424 = vmatpush2.msra.mxu0 %v140
  %1425 = vmatprep.subr.mxu0 %v137
  %1426 = vmatpush2.msra.mxu0 %v136
  %1427 = vmatprep.subr.mxu0 %v133
  %1428 = vmatpush2.msra.mxu0 %v132
  %1429 = vmatprep.subr.mxu0 %v129
  %1430 = vmatpush2.msra.mxu0 %v128
  %1431 = vmatprep.subr.mxu0 %v125
  %1432 = vmatpush2.msra.mxu0 %v124
  %1433 = vmatprep.subr.mxu0 %v121
  %1434 = vmatpush2.msra.mxu0 %v120
  %1435 = vmatprep.subr.mxu0 %v117
  %1436 = vmatpush2.msra.mxu0 %v116
  %1437 = vmatprep.subr.mxu0 %v113
  %1438 = vmatpush2.msra.mxu0 %v112
  %1439 = vmatprep.subr.mxu0 %v109
  %1440 = vmatpush2.msra.mxu0 %v108
  %1441 = vmatprep.subr.mxu0 %v105
  %1442 = vmatpush2.msra.mxu0 %v104
  %1443 = vmatprep.subr.mxu0 %v101
  %1444 = vmatpush2.msra.mxu0 %v100
  %1445 = vmatprep.subr.mxu0 %v97
  %1446 = vmatpush2.msra.mxu0 %v96
  %1447 = vmatprep.subr.mxu0 %v93
  %1448 = vmatpush2.msra.mxu0 %v92
  %1449 = vmatprep.subr.mxu0 %v89
  %1450 = vmatpush2.msra.mxu0 %v88
  %1451 = vmatprep.subr.mxu0 %v85
  %1452 = vmatpush2.msra.mxu0 %v84
  %1453 = vmatprep.mubr.f32.mxu0 %v1388
  %1454 = vmatmul.mubr.f32.gmra.mxu0 %v1387
  %v1455 = vpop.f32.mrf.mxu0
  %v1456 = vadd.f32 %v155, %v1455
  %v1457 = vpop.f32.mrf.mxu0
  %v1458 = vadd.f32 %v159, %v1457
  %1459 = vdwg.mxu0
  %1460 = vmatprep.subr.mxu0 %v83
  %1461 = vmatpush1.msra.mxu0 %v82
  %1462 = vmatprep.subr.mxu0 %v79
  %1463 = vmatpush1.msra.mxu0 %v78
  %1464 = vmatprep.subr.mxu0 %v75
  %1465 = vmatpush1.msra.mxu0 %v74
  %1466 = vmatprep.subr.mxu0 %v71
  %1467 = vmatpush1.msra.mxu0 %v70
  %1468 = vmatprep.subr.mxu0 %v67
  %1469 = vmatpush1.msra.mxu0 %v66
  %1470 = vmatprep.subr.mxu0 %v63
  %1471 = vmatpush1.msra.mxu0 %v62
  %1472 = vmatprep.subr.mxu0 %v59
  %1473 = vmatpush1.msra.mxu0 %v58
  %1474 = vmatprep.subr.mxu0 %v55
  %1475 = vmatpush1.msra.mxu0 %v54
  %1476 = vmatprep.subr.mxu0 %v51
  %1477 = vmatpush1.msra.mxu0 %v50
  %1478 = vmatprep.subr.mxu0 %v47
  %1479 = vmatpush1.msra.mxu0 %v46
  %1480 = vmatprep.subr.mxu0 %v43
  %1481 = vmatpush1.msra.mxu0 %v42
  %1482 = vmatprep.subr.mxu0 %v39
  %1483 = vmatpush1.msra.mxu0 %v38
  %1484 = vmatprep.subr.mxu0 %v35
  %1485 = vmatpush1.msra.mxu0 %v34
  %1486 = vmatprep.subr.mxu0 %v31
  %1487 = vmatpush1.msra.mxu0 %v30
  %1488 = vmatprep.subr.mxu0 %v27
  %1489 = vmatpush1.msra.mxu0 %v26
  %1490 = vmatprep.subr.mxu0 %v23
  %1491 = vmatpush1.msra.mxu0 %v22
  %1492 = vmatprep.subr.mxu0 %v147
  %1493 = vmatpush2.msra.mxu0 %v146
  %1494 = vmatprep.subr.mxu0 %v143
  %1495 = vmatpush2.msra.mxu0 %v142
  %1496 = vmatprep.subr.mxu0 %v139
  %1497 = vmatpush2.msra.mxu0 %v138
  %1498 = vmatprep.subr.mxu0 %v135
  %1499 = vmatpush2.msra.mxu0 %v134
  %1500 = vmatprep.subr.mxu0 %v131
  %1501 = vmatpush2.msra.mxu0 %v130
  %1502 = vmatprep.subr.mxu0 %v127
  %1503 = vmatpush2.msra.mxu0 %v126
  %1504 = vmatprep.subr.mxu0 %v123
  %1505 = vmatpush2.msra.mxu0 %v122
  %1506 = vmatprep.subr.mxu0 %v119
  %1507 = vmatpush2.msra.mxu0 %v118
  %1508 = vmatprep.subr.mxu0 %v115
  %1509 = vmatpush2.msra.mxu0 %v114
  %1510 = vmatprep.subr.mxu0 %v111
  %1511 = vmatpush2.msra.mxu0 %v110
  %1512 = vmatprep.subr.mxu0 %v107
  %1513 = vmatpush2.msra.mxu0 %v106
  %1514 = vmatprep.subr.mxu0 %v103
  %1515 = vmatpush2.msra.mxu0 %v102
  %1516 = vmatprep.subr.mxu0 %v99
  %1517 = vmatpush2.msra.mxu0 %v98
  %1518 = vmatprep.subr.mxu0 %v95
  %1519 = vmatpush2.msra.mxu0 %v94
  %1520 = vmatprep.subr.mxu0 %v91
  %1521 = vmatpush2.msra.mxu0 %v90
  %1522 = vmatprep.subr.mxu0 %v87
  %1523 = vmatpush2.msra.mxu0 %v86
  %1524 = vmatprep.mubr.f32.mxu0 %v1388
  %1525 = vmatmul.mubr.f32.gmra.mxu0 %v1387
  %v1526 = vpop.f32.mrf.mxu0
  %v1527 = vadd.f32 %v163, %v1526
  %v1528 = vpop.f32.mrf.mxu0
  %v1529 = vadd.f32 %v167, %v1528
  %1530 = vdwg.mxu0
  %v1531 = vxor.u32 %v1456, 2147483648
  %v1532 = vmul.f32 %v1531, 1.442695
  %v1533 = vpow.pop %v1532
  %v1534 = vadd.f32 %v1533, 1.0
  %v1535 = vrcp.pop %v1534
  %v1536 = vmul.f32 1.0, %v1535
  %v1537 = vxor.u32 %v1458, 2147483648
  %v1538 = vmul.f32 %v1537, 1.442695
  %v1539 = vpow.pop %v1538
  %v1540 = vadd.f32 %v1539, 1.0
  %v1541 = vrcp.pop %v1540
  %v1542 = vmul.f32 1.0, %v1541
  %v1543 = vtanh.pop %v1527
  %v1544 = vxor.u32 %v1529, 2147483648
  %v1545 = vmul.f32 %v1544, 1.442695
  %v1546 = vpow.pop %v1545
  %v1547 = vadd.f32 %v1546, 1.0
  %v1548 = vrcp.pop %v1547
  %v1549 = vmul.f32 1.0, %v1548
  %v1550 = vld [vmem:[#allocation3] sm:$0xff]
  %v1551 = vmul.f32 %v1542, %v1550
  %v1552 = vmul.f32 %v1536, %v1543
  %v1553 = vadd.f32 %v1551, %v1552
  %v1554 = vtanh.pop %v1553
  %v1555 = vmul.f32 %v1549, %v1554
  %1556 = vst [vmem:[#allocation3] sm:$0xff] %v1553
  %1557 = vst [vmem:[#allocation2] sm:$0xff] %v1555
  %s1558 = scalar_lea.vmem %s3, 56
  %1559 = vst [vmem:[%s1558] sm:$0xff] %v1555
  // Predicated region
  $region18: #{lstm_fc_pallas.2} parent=0 // pred_check
    _
  $region19: #{lstm_fc_pallas.2} parent=0 // pred_check_branch
    %1561 = sbr.rel (0) target = $region21
  $region20: #{lstm_fc_pallas.2} parent=0 // pred_region
    _
  $region21: #{lstm_fc_pallas.2} parent=0 // pred_fallthru
    _
  // Predicated region
  $region22: #{lstm_fc_pallas.2} parent=0 // pred_check
    _
  $region23: #{lstm_fc_pallas.2} parent=0 // pred_check_branch
    %1563 = sbr.rel (0) target = $region25
  $region24: #{lstm_fc_pallas.2} parent=0 // pred_region
    _
  $region25: #{lstm_fc_pallas.2} parent=0 // pred_fallthru
    _

</llo_original>
